<compile_context>
chip_gen: v7x
topology: tpu7x:2x2x1
jax: 0.10.0
libtpu: 0.0.40
codegen_flags: <defaults>
</compile_context>

<pallas_src>
import functools

import jax
import jax.numpy as jnp
from jax.experimental import pallas as pl
from jax.experimental.pallas import tpu as pltpu


def _round_up(a, b):
    return (a + b - 1) // b * b


def rfa_kernel(x_ref, h_ref,
               wzrx_ref, wzrh_ref, whx_ref, whh_ref,
               bzr_ref, bh_ref,
               o_ref):
    """Per-tile RFA/GRU gating in (C, tn) channels-on-sublane layout.

    x_ref, h_ref, o_ref : (C, tn)     cur_f tile, pre_h tile, output tile (f32)
    wzrx_ref, wzrh_ref  : (2C, C)     stacked [W_z ; W_r] halves, bf16
    whx_ref, whh_ref    : (C, C)      candidate conv halves, bf16
    bzr_ref             : (2C, 1)     stacked [b_z ; b_r], f32
    bh_ref              : (C, 1)      candidate bias, f32
    """
    C = x_ref.shape[0]

    x = x_ref[...]                       # f32 (C, tn)
    h = h_ref[...]                       # f32 (C, tn)
    xb = x.astype(jnp.bfloat16)
    hb = h.astype(jnp.bfloat16)

    # Fused z/r gates: one (2C, tn) pre-activation from two MXU matmuls.
    zr_lin = (jnp.dot(wzrx_ref[...], xb, preferred_element_type=jnp.float32)
              + jnp.dot(wzrh_ref[...], hb, preferred_element_type=jnp.float32)
              + bzr_ref[...])
    zr = jax.nn.sigmoid(zr_lin)          # f32 elementwise (EUP)
    z = zr[:C, :]
    r = zr[C:, :]

    # Candidate: relu(conv_h([r*x ; h]))
    rx = (r * x).astype(jnp.bfloat16)
    hh_lin = (jnp.dot(whx_ref[...], rx, preferred_element_type=jnp.float32)
              + jnp.dot(whh_ref[...], hb, preferred_element_type=jnp.float32)
              + bh_ref[...])
    h_hat = jnp.maximum(hh_lin, 0.0)

    o_ref[...] = ((1.0 - z) * x + z * h_hat).astype(o_ref.dtype)


def _fold_bn(W, b, gamma, beta, mean, var, eps=1e-5):
    """Fold inference-mode BatchNorm1d into a 1x1-conv weight/bias.

    W: (C_out, C_in), b/gamma/beta/mean/var: (C_out,)
    """
    scale = gamma / jnp.sqrt(var + eps)
    W_f = W * scale[:, None]
    b_f = scale * (b - mean) + beta
    return W_f, b_f


@functools.partial(jax.jit, static_argnames=("up_ratio", "tn"))
def _rfa_forward_impl(cur_f, pre_h, params, up_ratio, tn):
    B, C, N = cur_f.shape

    if up_ratio > 1:
        # TODO(synk): fold nearest-neighbor upsampling into pre_h's BlockSpec
        # index_map (block j -> j // up_ratio) to avoid this extra HBM pass.
        pre_h = jnp.repeat(pre_h, up_ratio, axis=2)
    assert pre_h.shape == cur_f.shape, "pre_h must match cur_f after upsampling"

    # ---- Fold BN into each conv, split concat-weights, fuse z/r slabs. ----
    def prep(name):
        W, b = params[name + "_w"], params[name + "_b"]            # (C, 2C), (C,)
        g, be = params[name + "_bn_gamma"], params[name + "_bn_beta"]
        mu, var = params[name + "_bn_mean"], params[name + "_bn_var"]
        Wf, bf = _fold_bn(W, b, g, be, mu, var)
        return Wf[:, :C], Wf[:, C:], bf                            # (C,C),(C,C),(C,)

    wzx, wzh, bz = prep("conv_z")
    wrx, wrh, br = prep("conv_r")
    whx, whh, bh = prep("conv_h")

    w_zr_x = jnp.concatenate([wzx, wrx], axis=0).astype(jnp.bfloat16)   # (2C, C)
    w_zr_h = jnp.concatenate([wzh, wrh], axis=0).astype(jnp.bfloat16)   # (2C, C)
    w_h_x = whx.astype(jnp.bfloat16)                                    # (C, C)
    w_h_h = whh.astype(jnp.bfloat16)                                    # (C, C)
    b_zr = jnp.concatenate([bz, br], axis=0).reshape(2 * C, 1)          # (2C, 1) f32
    b_h = bh.reshape(C, 1)                                              # (C, 1)  f32

    # ---- Lane tiling over N (keep lane dim a multiple of 128, pad if not). ----
    tn_eff = min(tn, _round_up(N, 128))
    N_pad = _round_up(N, tn_eff)
    if N_pad != N:
        pad = ((0, 0), (0, 0), (0, N_pad - N))
        x3 = jnp.pad(cur_f, pad)
        h3 = jnp.pad(pre_h, pad)
    else:
        x3, h3 = cur_f, pre_h

    grid = (B, N_pad // tn_eff)

    act_spec = pl.BlockSpec((None, C, tn_eff), lambda b, j: (b, 0, j))
    w2_spec = pl.BlockSpec((2 * C, C), lambda b, j: (0, 0))
    w1_spec = pl.BlockSpec((C, C), lambda b, j: (0, 0))
    b2_spec = pl.BlockSpec((2 * C, 1), lambda b, j: (0, 0))
    b1_spec = pl.BlockSpec((C, 1), lambda b, j: (0, 0))

    # VMEM budget: double-buffered x/h/out tiles + resident weight/bias slabs,
    # with 2x slack (fits comfortably inside v7x's 64 MiB physical VMEM).
    tile_bytes = C * tn_eff * 4
    weight_bytes = (2 * (2 * C * C) + 2 * (C * C)) * 2 + 3 * C * 4
    vmem_limit = min(4 * (3 * tile_bytes + weight_bytes) + (4 << 20), 64 << 20)

    out3 = pl.pallas_call(
        rfa_kernel,
        out_shape=jax.ShapeDtypeStruct((B, C, N_pad), cur_f.dtype),
        grid_spec=pltpu.PrefetchScalarGridSpec(
            num_scalar_prefetch=0,
            grid=grid,
            in_specs=[act_spec, act_spec,
                      w2_spec, w2_spec, w1_spec, w1_spec,
                      b2_spec, b1_spec],
            out_specs=act_spec,
        ),
        compiler_params=pltpu.CompilerParams(
            dimension_semantics=("parallel", "parallel"),
            vmem_limit_bytes=int(vmem_limit),
        ),
    )(x3, h3, w_zr_x, w_zr_h, w_h_x, w_h_h, b_zr, b_h)

    h_out = out3[:, :, :N] if N_pad != N else out3
    return h_out, h_out


def rfa_forward(cur_f, pre_h, params, up_ratio=1, tn=512):
    """RFA forward.  cur_f: (B, C, N); pre_h: (B, C, N // up_ratio) or None."""
    if pre_h is None:
        return cur_f, cur_f                      # is_step_1 / no-history path
    return _rfa_forward_impl(cur_f, pre_h, params, up_ratio, tn)


def init_params(key, in_channel):
    """Deterministic parameter init matching RFA(__init__) shapes.

    Each Conv1d(in_channel*2 -> in_channel, k=1) has:
      weight (C, 2C, 1) -> stored as (C, 2C); bias (C,)
      BatchNorm1d(C): gamma, beta, running_mean, running_var.
    """
    C = in_channel
    params = {}
    for name in ("conv_z", "conv_r", "conv_h"):
        key, k1, k2, k3, k4, k5, k6 = jax.random.split(key, 7)
        params[name + "_w"] = jax.random.normal(k1, (C, 2 * C), jnp.float32) * 0.05
        params[name + "_b"] = jax.random.normal(k2, (C,), jnp.float32) * 0.05
        params[name + "_bn_gamma"] = 1.0 + 0.1 * jax.random.normal(k3, (C,), jnp.float32)
        params[name + "_bn_beta"] = 0.1 * jax.random.normal(k4, (C,), jnp.float32)
        params[name + "_bn_mean"] = 0.1 * jax.random.normal(k5, (C,), jnp.float32)
        params[name + "_bn_var"] = 1.0 + 0.1 * jax.random.uniform(k6, (C,), jnp.float32)
    return params


def rfa_reference(cur_f, pre_h, params, up_ratio=1):
    """Pure-JAX f32 reference (same BN-folding math) for a sanity check."""
    B, C, N = cur_f.shape
    if up_ratio > 1:
        pre_h = jnp.repeat(pre_h, up_ratio, axis=2)

    def conv_bn(name, x):  # x: (B, 2C, N)
        W, b = params[name + "_w"], params[name + "_b"]
        g, be = params[name + "_bn_gamma"], params[name + "_bn_beta"]
        mu, var = params[name + "_bn_mean"], params[name + "_bn_var"]
        Wf, bf = _fold_bn(W, b, g, be, mu, var)
        return jnp.einsum("oc,bcn->bon", Wf, x) + bf[None, :, None]

    cat = jnp.concatenate([cur_f, pre_h], axis=1)
    z = jax.nn.sigmoid(conv_bn("conv_z", cat))
    r = jax.nn.sigmoid(conv_bn("conv_r", cat))
    cat2 = jnp.concatenate([r * cur_f, pre_h], axis=1)
    h_hat = jnp.maximum(conv_bn("conv_h", cat2), 0.0)
    h = (1.0 - z) * cur_f + z * h_hat
    return h


if __name__ == "__main__":
    B, C, N = 2, 64, 1024          # (batch, in_channel, num_points)

    key = jax.random.PRNGKey(0)
    k_f, k_h, k_p = jax.random.split(key, 3)
    cur_f = jax.random.normal(k_f, (B, C, N), jnp.float32)
    pre_h = jax.random.normal(k_h, (B, C, N), jnp.float32)
    params = init_params(k_p, C)

    # up_ratio = 1 path
    h_out, h_out2 = rfa_forward(cur_f, pre_h, params, up_ratio=1, tn=512)
    jax.block_until_ready(h_out)
    ref = rfa_reference(cur_f, pre_h, params, up_ratio=1)
    assert h_out.shape == (B, C, N) and h_out2.shape == (B, C, N)
    max_err = float(jnp.max(jnp.abs(h_out - ref)))
    # bf16 matmul operands vs. f32 reference -> loosened tolerance.
    assert jnp.allclose(h_out, ref, atol=5e-2, rtol=5e-2), f"mismatch: {max_err}"

    # up_ratio = 2 (nearest-neighbor upsample of pre_h) path
    pre_h_small = jax.random.normal(k_h, (B, C, N // 2), jnp.float32)
    h_up, _ = rfa_forward(cur_f, pre_h_small, params, up_ratio=2, tn=512)
    jax.block_until_ready(h_up)
    ref_up = rfa_reference(cur_f, pre_h_small, params, up_ratio=2)
    assert jnp.allclose(h_up, ref_up, atol=5e-2, rtol=5e-2), "up_ratio=2 mismatch"

    print("KERNEL_OK")
</pallas_src>

<mosaic_0001>
module attributes {stable_mosaic.version = 11 : i64} {
  func.func @rfa_kernel(%arg0: i32, %arg1: i32, %arg2: memref<1x64x512xf32, #tpu.memory_space<vmem>>, %arg3: memref<1x64x512xf32, #tpu.memory_space<vmem>>, %arg4: memref<128x64xbf16, #tpu.memory_space<vmem>>, %arg5: memref<128x64xbf16, #tpu.memory_space<vmem>>, %arg6: memref<64x64xbf16, #tpu.memory_space<vmem>>, %arg7: memref<64x64xbf16, #tpu.memory_space<vmem>>, %arg8: memref<128x1xf32, #tpu.memory_space<vmem>>, %arg9: memref<64x1xf32, #tpu.memory_space<vmem>>, %arg10: memref<1x64x512xf32, #tpu.memory_space<vmem>>) attributes {dimension_semantics = [#tpu.dimension_semantics<parallel>, #tpu.dimension_semantics<parallel>], iteration_bounds = array<i64: 2, 2>, scalar_prefetch = 0 : i64, scratch_operands = 0 : i64, tpu.core_type = #tpu.core_type<tc>, window_params = [{transform_indices = @transform_0, window_bounds = array<i64: 1, 64, 512>}, {transform_indices = @transform_1, window_bounds = array<i64: 1, 64, 512>}, {pipeline_mode = #tpu.pipeline_mode<synchronous>, transform_indices = @transform_2, window_bounds = array<i64: 128, 64>}, {pipeline_mode = #tpu.pipeline_mode<synchronous>, transform_indices = @transform_3, window_bounds = array<i64: 128, 64>}, {pipeline_mode = #tpu.pipeline_mode<synchronous>, transform_indices = @transform_4, window_bounds = array<i64: 64, 64>}, {pipeline_mode = #tpu.pipeline_mode<synchronous>, transform_indices = @transform_5, window_bounds = array<i64: 64, 64>}, {pipeline_mode = #tpu.pipeline_mode<synchronous>, transform_indices = @transform_6, window_bounds = array<i64: 128, 1>}, {pipeline_mode = #tpu.pipeline_mode<synchronous>, transform_indices = @transform_7, window_bounds = array<i64: 64, 1>}, {transform_indices = @transform_8, window_bounds = array<i64: 1, 64, 512>}]} {
    %c0 = arith.constant 0 : index
    %c0_0 = arith.constant 0 : index
    %c0_1 = arith.constant 0 : index
    %0 = vector.load %arg2[%c0, %c0_0, %c0_1] : memref<1x64x512xf32, #tpu.memory_space<vmem>>, vector<1x64x512xf32>
    %1 = vector.shape_cast %0 : vector<1x64x512xf32> to vector<64x512xf32>
    %c0_2 = arith.constant 0 : index
    %c0_3 = arith.constant 0 : index
    %c0_4 = arith.constant 0 : index
    %2 = vector.load %arg3[%c0_2, %c0_3, %c0_4] : memref<1x64x512xf32, #tpu.memory_space<vmem>>, vector<1x64x512xf32>
    %3 = vector.shape_cast %2 : vector<1x64x512xf32> to vector<64x512xf32>
    %4 = arith.truncf %1 : vector<64x512xf32> to vector<64x512xbf16>
    %5 = arith.truncf %3 : vector<64x512xf32> to vector<64x512xbf16>
    %c0_5 = arith.constant 0 : index
    %c0_6 = arith.constant 0 : index
    %6 = vector.load %arg4[%c0_5, %c0_6] : memref<128x64xbf16, #tpu.memory_space<vmem>>, vector<128x64xbf16>
    %cst = arith.constant dense<0.000000e+00> : vector<128x512xf32>
    %7 = tpu.matmul %6, %4, %cst {dimension_numbers = #tpu.dot_dimension_numbers<[1], [0], [0], [1], [0, 0, 1, 1], [], []>} : vector<128x64xbf16>, vector<64x512xbf16>, vector<128x512xf32> -> vector<128x512xf32>
    %c0_7 = arith.constant 0 : index
    %c0_8 = arith.constant 0 : index
    %8 = vector.load %arg5[%c0_7, %c0_8] : memref<128x64xbf16, #tpu.memory_space<vmem>>, vector<128x64xbf16>
    %cst_9 = arith.constant dense<0.000000e+00> : vector<128x512xf32>
    %9 = tpu.matmul %8, %5, %cst_9 {dimension_numbers = #tpu.dot_dimension_numbers<[1], [0], [0], [1], [0, 0, 1, 1], [], []>} : vector<128x64xbf16>, vector<64x512xbf16>, vector<128x512xf32> -> vector<128x512xf32>
    %10 = arith.addf %7, %9 : vector<128x512xf32>
    %c0_10 = arith.constant 0 : index
    %c0_11 = arith.constant 0 : index
    %11 = vector.load %arg8[%c0_10, %c0_11] : memref<128x1xf32, #tpu.memory_space<vmem>>, vector<128x1xf32>
    %12 = vector.broadcast %11 : vector<128x1xf32> to vector<128x512xf32>
    %13 = arith.addf %10, %12 : vector<128x512xf32>
    %14 = arith.negf %13 : vector<128x512xf32>
    %15 = math.exp %14 : vector<128x512xf32>
    %cst_12 = arith.constant 1.000000e+00 : f32
    %16 = vector.broadcast %cst_12 : f32 to vector<128x512xf32>
    %17 = arith.addf %16, %15 : vector<128x512xf32>
    %18 = arith.divf %16, %17 : vector<128x512xf32>
    %19 = vector.extract_strided_slice %18 {offsets = [0, 0], sizes = [64, 512], strides = [1, 1]} : vector<128x512xf32> to vector<64x512xf32>
    %20 = vector.extract_strided_slice %18 {offsets = [64, 0], sizes = [64, 512], strides = [1, 1]} : vector<128x512xf32> to vector<64x512xf32>
    %21 = arith.mulf %20, %1 : vector<64x512xf32>
    %22 = arith.truncf %21 : vector<64x512xf32> to vector<64x512xbf16>
    %c0_13 = arith.constant 0 : index
    %c0_14 = arith.constant 0 : index
    %23 = vector.load %arg6[%c0_13, %c0_14] : memref<64x64xbf16, #tpu.memory_space<vmem>>, vector<64x64xbf16>
    %cst_15 = arith.constant dense<0.000000e+00> : vector<64x512xf32>
    %24 = tpu.matmul %23, %22, %cst_15 {dimension_numbers = #tpu.dot_dimension_numbers<[1], [0], [0], [1], [0, 0, 1, 1], [], []>} : vector<64x64xbf16>, vector<64x512xbf16>, vector<64x512xf32> -> vector<64x512xf32>
    %c0_16 = arith.constant 0 : index
    %c0_17 = arith.constant 0 : index
    %25 = vector.load %arg7[%c0_16, %c0_17] : memref<64x64xbf16, #tpu.memory_space<vmem>>, vector<64x64xbf16>
    %cst_18 = arith.constant dense<0.000000e+00> : vector<64x512xf32>
    %26 = tpu.matmul %25, %5, %cst_18 {dimension_numbers = #tpu.dot_dimension_numbers<[1], [0], [0], [1], [0, 0, 1, 1], [], []>} : vector<64x64xbf16>, vector<64x512xbf16>, vector<64x512xf32> -> vector<64x512xf32>
    %27 = arith.addf %24, %26 : vector<64x512xf32>
    %c0_19 = arith.constant 0 : index
    %c0_20 = arith.constant 0 : index
    %28 = vector.load %arg9[%c0_19, %c0_20] : memref<64x1xf32, #tpu.memory_space<vmem>>, vector<64x1xf32>
    %29 = vector.broadcast %28 : vector<64x1xf32> to vector<64x512xf32>
    %30 = arith.addf %27, %29 : vector<64x512xf32>
    %cst_21 = arith.constant 0.000000e+00 : f32
    %31 = vector.broadcast %cst_21 : f32 to vector<64x512xf32>
    %32 = arith.maximumf %30, %31 : vector<64x512xf32>
    %cst_22 = arith.constant 1.000000e+00 : f32
    %33 = vector.broadcast %cst_22 : f32 to vector<64x512xf32>
    %34 = arith.subf %33, %19 : vector<64x512xf32>
    %35 = arith.mulf %34, %1 : vector<64x512xf32>
    %36 = arith.mulf %19, %32 : vector<64x512xf32>
    %37 = arith.addf %35, %36 : vector<64x512xf32>
    %c0_23 = arith.constant 0 : index
    %c0_24 = arith.constant 0 : index
    %c0_25 = arith.constant 0 : index
    %38 = vector.load %arg10[%c0_23, %c0_24, %c0_25] : memref<1x64x512xf32, #tpu.memory_space<vmem>>, vector<1x64x512xf32>
    %39 = vector.shape_cast %38 : vector<1x64x512xf32> to vector<64x512xf32>
    %40 = vector.shape_cast %37 : vector<64x512xf32> to vector<1x64x512xf32>
    tpu.vector_store %arg10[%c0_23, %c0_24, %c0_25], %40 {strides = array<i32>} : memref<1x64x512xf32, #tpu.memory_space<vmem>>, vector<1x64x512xf32>,
    return
  }
  func.func @transform_0(%arg0: i32, %arg1: i32) -> (i32, i32, i32) {
    %c0_i32 = arith.constant 0 : i32
    %c0_i32_0 = arith.constant 0 : i32
    return %arg0, %c0_i32, %arg1 : i32, i32, i32
  }
  func.func @transform_1(%arg0: i32, %arg1: i32) -> (i32, i32, i32) {
    %c0_i32 = arith.constant 0 : i32
    %c0_i32_0 = arith.constant 0 : i32
    return %arg0, %c0_i32, %arg1 : i32, i32, i32
  }
  func.func @transform_2(%arg0: i32, %arg1: i32) -> (i32, i32) {
    %c0_i32 = arith.constant 0 : i32
    %c0_i32_0 = arith.constant 0 : i32
    %c0_i32_1 = arith.constant 0 : i32
    return %c0_i32, %c0_i32_0 : i32, i32
  }
  func.func @transform_3(%arg0: i32, %arg1: i32) -> (i32, i32) {
    %c0_i32 = arith.constant 0 : i32
    %c0_i32_0 = arith.constant 0 : i32
    %c0_i32_1 = arith.constant 0 : i32
    return %c0_i32, %c0_i32_0 : i32, i32
  }
  func.func @transform_4(%arg0: i32, %arg1: i32) -> (i32, i32) {
    %c0_i32 = arith.constant 0 : i32
    %c0_i32_0 = arith.constant 0 : i32
    %c0_i32_1 = arith.constant 0 : i32
    return %c0_i32, %c0_i32_0 : i32, i32
  }
  func.func @transform_5(%arg0: i32, %arg1: i32) -> (i32, i32) {
    %c0_i32 = arith.constant 0 : i32
    %c0_i32_0 = arith.constant 0 : i32
    %c0_i32_1 = arith.constant 0 : i32
    return %c0_i32, %c0_i32_0 : i32, i32
  }
  func.func @transform_6(%arg0: i32, %arg1: i32) -> (i32, i32) {
    %c0_i32 = arith.constant 0 : i32
    %c0_i32_0 = arith.constant 0 : i32
    %c0_i32_1 = arith.constant 0 : i32
    return %c0_i32, %c0_i32_0 : i32, i32
  }
  func.func @transform_7(%arg0: i32, %arg1: i32) -> (i32, i32) {
    %c0_i32 = arith.constant 0 : i32
    %c0_i32_0 = arith.constant 0 : i32
    %c0_i32_1 = arith.constant 0 : i32
    return %c0_i32, %c0_i32_0 : i32, i32
  }
  func.func @transform_8(%arg0: i32, %arg1: i32) -> (i32, i32, i32) {
    %c0_i32 = arith.constant 0 : i32
    %c0_i32_0 = arith.constant 0 : i32
    return %arg0, %c0_i32, %arg1 : i32, i32, i32
  }
}

</mosaic_0001>

<llo_original>
// kernel: _rfa_forward_impl.1
$region0: #{_rfa_forward_impl.1}
  #allocation0 [shape = 'u32[]', space=smem, size = 0x4, offset = 0x4, fixed_abs, tag = 'smem constant byte address 0x4 - core index']
  #allocation1 [shape = 'u32[144,128]{1,0:T(1,128)}', space=vmem, size = 0x12000, scoped, tag = 'internal scratch']
  %s0 = inlined_call_operand.vmem [shape: f32[2,64,1024], index: 0, kind: input, shape index: {}]
  %s1 = inlined_call_operand.hbm [shape: f32[2,64,1024], index: 1, kind: input, shape index: {}]
  %s2 = inlined_call_operand.vmem [shape: bf16[128,64], index: 2, kind: input, shape index: {}]
  %s3 = inlined_call_operand.vmem [shape: bf16[128,64], index: 3, kind: input, shape index: {}]
  %s4 = inlined_call_operand.vmem [shape: bf16[64,64], index: 4, kind: input, shape index: {}]
  %s5 = inlined_call_operand.vmem [shape: bf16[64,64], index: 5, kind: input, shape index: {}]
  %s6 = inlined_call_operand.vmem [shape: f32[128,1], index: 6, kind: input, shape index: {}]
  %s7 = inlined_call_operand.vmem [shape: f32[64,1], index: 7, kind: input, shape index: {}]
  %s8 = inlined_call_operand.vmem [shape: f32[2,64,1024], index: 8, kind: output, shape index: {}]
  %s9 = sld [smem:[#allocation0]]
  $region111: #{_rfa_forward_impl.1} parent=0
    _
  %s11 = ssub.s32 1, %s9
  %s12 = scalar_select 0, %s11, %s9
  $region1: #{_rfa_forward_impl.1} parent=0
    #allocation2 [shape = 'u8[262144]{0}', space=vmem, size = 0x40000, scoped, tag = 'input window, operand 0']
    #allocation3 [shape = 'u8[262144]{0}', space=vmem, size = 0x40000, scoped, tag = 'input window, operand 1']
    #allocation4 [shape = 's32[2]{0}', space=sflag, size = 0x8, scoped, tag = 'scoped memory for _rfa_forward_impl.1']
    #allocation5 [shape = 'u8[262144]{0}', space=vmem, size = 0x40000, scoped, tag = 'output window, operand 0']
    %13 = vsyncpa [#allocation4], 0
    %s14 = scalar_lea.sflag [#allocation4], 1
    %15 = vsyncpa %s14, 0
    loop: start=0, step=1, limit=6
    $region2: #{_rfa_forward_impl.1} parent=1 // loop_pre_header
      _
    $region3: #{_rfa_forward_impl.1} parent=1 // loop_header
      %s17 = sphi 0, %s21
      %p18 = scmp.ge.s32.totalorder %s17, 6
      %s24 = sphi 0, %s36
      %s25 = sphi 0, %s32
      %s26 = sphi 0, %s24
      %s27 = sphi 0, %s25
      %s28 = sphi 0, %s26
      %s29 = sphi 0, %s27
      %s41 = sphi 0, %s43
      %s44 = sphi 0, %s41
      %s45 = sphi 0, %s44
      %s61 = sphi 0, %s45
      %s69 = sphi 0, %s71
      %s72 = sphi 0, %s69
      %s73 = sphi 0, %s72
      %s89 = sphi 0, %s73
      %s93 = sphi 0, %s93
      %s95 = sphi 0, %s93
      %s96 = sphi 0, %s95
      %s110 = sphi 0, %s96
      %s114 = sphi 0, %s114
      %s116 = sphi 0, %s114
      %s117 = sphi 0, %s116
      %s131 = sphi 0, %s117
      %s135 = sphi 0, %s135
      %s137 = sphi 0, %s135
      %s138 = sphi 0, %s137
      %s152 = sphi 0, %s138
      %s156 = sphi 0, %s156
      %s158 = sphi 0, %s156
      %s159 = sphi 0, %s158
      %s173 = sphi 0, %s159
      %s177 = sphi 0, %s177
      %s179 = sphi 0, %s177
      %s180 = sphi 0, %s179
      %s194 = sphi 0, %s180
      %s198 = sphi 0, %s198
      %s200 = sphi 0, %s198
      %s201 = sphi 0, %s200
      %s215 = sphi 0, %s201
      %s223 = sphi 0, %s225
      %s226 = sphi 0, %s223
      %s227 = sphi 0, %s226
      %s243 = sphi 0, %s227
    $region4: #{_rfa_forward_impl.1} parent=1 // loop_header_branch
      %20 = sbr.rel (%p18) target = $region8
    $region5: #{_rfa_forward_impl.1} parent=1 // loop_body
      %s22 = ssub.s32 %s17, 1
      %s23 = ssub.s32 %s17, 2
      %s30 = sadd.s32 1, %s25
      %p31 = scmp.ge.s32.totalorder %s30, 2
      %s32 = scalar_select %p31, 0, %s30
      %s33 = sadd.s32 1, %s24
      %s34 = scalar_select %p31, %s33, %s24
      %p35 = scmp.ge.s32.totalorder %s34, 2
      %s36 = scalar_select %p35, 0, %s34
      %s37 = ssub.s32 %s24, %s36
      %s38 = ssub.s32 %s25, %s32
      %s39 = sor.u32 %s37, %s38
      %p40 = scmp.eq.s32.totalorder %s39, 0
      %s42 = sadd.s32 %s41, 1
      %s43 = scalar_select %p40, %s41, %s42
      %p46 = pneg %p40
      %p47 = scmp.eq.s32.totalorder %s17, 3
      %p48 = por %p46, %p47
      %p49 = scmp.ne.s32.totalorder %s41, %s44
      %p50 = scmp.eq.s32.totalorder %s17, 0
      %p51 = por %p49, %p50
      %p52 = scmp.ne.s32.totalorder %s41, %s44
      %p53 = scmp.eq.s32.totalorder %s22, 3
      %p54 = por %p52, %p53
      %p55 = scmp.ne.s32.totalorder %s44, %s45
      %p56 = scmp.eq.s32.totalorder %s22, 0
      %p57 = por %p55, %p56
      %p58 = scmp.ne.s32.totalorder %s44, %s45
      %p59 = scmp.eq.s32.totalorder %s23, 3
      %p60 = por %p58, %p59
      %p62 = scmp.ne.s32.totalorder %s45, %s61
      %p63 = scmp.eq.s32.totalorder %s23, 0
      %p64 = por %p62, %p63
      %s65 = ssub.s32 %s24, %s36
      %s66 = ssub.s32 %s25, %s32
      %s67 = sor.u32 %s65, %s66
      %p68 = scmp.eq.s32.totalorder %s67, 0
      %s70 = sadd.s32 %s69, 1
      %s71 = scalar_select %p68, %s69, %s70
      %p74 = pneg %p68
      %p75 = scmp.eq.s32.totalorder %s17, 3
      %p76 = por %p74, %p75
      %p77 = scmp.ne.s32.totalorder %s69, %s72
      %p78 = scmp.eq.s32.totalorder %s17, 0
      %p79 = por %p77, %p78
      %p80 = scmp.ne.s32.totalorder %s69, %s72
      %p81 = scmp.eq.s32.totalorder %s22, 3
      %p82 = por %p80, %p81
      %p83 = scmp.ne.s32.totalorder %s72, %s73
      %p84 = scmp.eq.s32.totalorder %s22, 0
      %p85 = por %p83, %p84
      %p86 = scmp.ne.s32.totalorder %s72, %s73
      %p87 = scmp.eq.s32.totalorder %s23, 3
      %p88 = por %p86, %p87
      %p90 = scmp.ne.s32.totalorder %s73, %s89
      %p91 = scmp.eq.s32.totalorder %s23, 0
      %p92 = por %p90, %p91
      %s94 = sadd.s32 %s93, 1
      %p97 = scmp.eq.s32.totalorder %s17, 3
      %p98 = scmp.ne.s32.totalorder %s93, %s95
      %p99 = scmp.eq.s32.totalorder %s17, 0
      %p100 = por %p98, %p99
      %p101 = scmp.ne.s32.totalorder %s93, %s95
      %p102 = scmp.eq.s32.totalorder %s22, 3
      %p103 = por %p101, %p102
      %p104 = scmp.ne.s32.totalorder %s95, %s96
      %p105 = scmp.eq.s32.totalorder %s22, 0
      %p106 = por %p104, %p105
      %p107 = scmp.ne.s32.totalorder %s95, %s96
      %p108 = scmp.eq.s32.totalorder %s23, 3
      %p109 = por %p107, %p108
      %p111 = scmp.ne.s32.totalorder %s96, %s110
      %p112 = scmp.eq.s32.totalorder %s23, 0
      %p113 = por %p111, %p112
      %s115 = sadd.s32 %s114, 1
      %p118 = scmp.eq.s32.totalorder %s17, 3
      %p119 = scmp.ne.s32.totalorder %s114, %s116
      %p120 = scmp.eq.s32.totalorder %s17, 0
      %p121 = por %p119, %p120
      %p122 = scmp.ne.s32.totalorder %s114, %s116
      %p123 = scmp.eq.s32.totalorder %s22, 3
      %p124 = por %p122, %p123
      %p125 = scmp.ne.s32.totalorder %s116, %s117
      %p126 = scmp.eq.s32.totalorder %s22, 0
      %p127 = por %p125, %p126
      %p128 = scmp.ne.s32.totalorder %s116, %s117
      %p129 = scmp.eq.s32.totalorder %s23, 3
      %p130 = por %p128, %p129
      %p132 = scmp.ne.s32.totalorder %s117, %s131
      %p133 = scmp.eq.s32.totalorder %s23, 0
      %p134 = por %p132, %p133
      %s136 = sadd.s32 %s135, 1
      %p139 = scmp.eq.s32.totalorder %s17, 3
      %p140 = scmp.ne.s32.totalorder %s135, %s137
      %p141 = scmp.eq.s32.totalorder %s17, 0
      %p142 = por %p140, %p141
      %p143 = scmp.ne.s32.totalorder %s135, %s137
      %p144 = scmp.eq.s32.totalorder %s22, 3
      %p145 = por %p143, %p144
      %p146 = scmp.ne.s32.totalorder %s137, %s138
      %p147 = scmp.eq.s32.totalorder %s22, 0
      %p148 = por %p146, %p147
      %p149 = scmp.ne.s32.totalorder %s137, %s138
      %p150 = scmp.eq.s32.totalorder %s23, 3
      %p151 = por %p149, %p150
      %p153 = scmp.ne.s32.totalorder %s138, %s152
      %p154 = scmp.eq.s32.totalorder %s23, 0
      %p155 = por %p153, %p154
      %s157 = sadd.s32 %s156, 1
      %p160 = scmp.eq.s32.totalorder %s17, 3
      %p161 = scmp.ne.s32.totalorder %s156, %s158
      %p162 = scmp.eq.s32.totalorder %s17, 0
      %p163 = por %p161, %p162
      %p164 = scmp.ne.s32.totalorder %s156, %s158
      %p165 = scmp.eq.s32.totalorder %s22, 3
      %p166 = por %p164, %p165
      %p167 = scmp.ne.s32.totalorder %s158, %s159
      %p168 = scmp.eq.s32.totalorder %s22, 0
      %p169 = por %p167, %p168
      %p170 = scmp.ne.s32.totalorder %s158, %s159
      %p171 = scmp.eq.s32.totalorder %s23, 3
      %p172 = por %p170, %p171
      %p174 = scmp.ne.s32.totalorder %s159, %s173
      %p175 = scmp.eq.s32.totalorder %s23, 0
      %p176 = por %p174, %p175
      %s178 = sadd.s32 %s177, 1
      %p181 = scmp.eq.s32.totalorder %s17, 3
      %p182 = scmp.ne.s32.totalorder %s177, %s179
      %p183 = scmp.eq.s32.totalorder %s17, 0
      %p184 = por %p182, %p183
      %p185 = scmp.ne.s32.totalorder %s177, %s179
      %p186 = scmp.eq.s32.totalorder %s22, 3
      %p187 = por %p185, %p186
      %p188 = scmp.ne.s32.totalorder %s179, %s180
      %p189 = scmp.eq.s32.totalorder %s22, 0
      %p190 = por %p188, %p189
      %p191 = scmp.ne.s32.totalorder %s179, %s180
      %p192 = scmp.eq.s32.totalorder %s23, 3
      %p193 = por %p191, %p192
      %p195 = scmp.ne.s32.totalorder %s180, %s194
      %p196 = scmp.eq.s32.totalorder %s23, 0
      %p197 = por %p195, %p196
      %s199 = sadd.s32 %s198, 1
      %p202 = scmp.eq.s32.totalorder %s17, 3
      %p203 = scmp.ne.s32.totalorder %s198, %s200
      %p204 = scmp.eq.s32.totalorder %s17, 0
      %p205 = por %p203, %p204
      %p206 = scmp.ne.s32.totalorder %s198, %s200
      %p207 = scmp.eq.s32.totalorder %s22, 3
      %p208 = por %p206, %p207
      %p209 = scmp.ne.s32.totalorder %s200, %s201
      %p210 = scmp.eq.s32.totalorder %s22, 0
      %p211 = por %p209, %p210
      %p212 = scmp.ne.s32.totalorder %s200, %s201
      %p213 = scmp.eq.s32.totalorder %s23, 3
      %p214 = por %p212, %p213
      %p216 = scmp.ne.s32.totalorder %s201, %s215
      %p217 = scmp.eq.s32.totalorder %s23, 0
      %p218 = por %p216, %p217
      %s219 = ssub.s32 %s24, %s36
      %s220 = ssub.s32 %s25, %s32
      %s221 = sor.u32 %s219, %s220
      %p222 = scmp.eq.s32.totalorder %s221, 0
      %s224 = sadd.s32 %s223, 1
      %s225 = scalar_select %p222, %s223, %s224
      %p228 = pneg %p222
      %p229 = scmp.eq.s32.totalorder %s17, 3
      %p230 = por %p228, %p229
      %p231 = scmp.ne.s32.totalorder %s223, %s226
      %p232 = scmp.eq.s32.totalorder %s17, 0
      %p233 = por %p231, %p232
      %p234 = scmp.ne.s32.totalorder %s223, %s226
      %p235 = scmp.eq.s32.totalorder %s22, 3
      %p236 = por %p234, %p235
      %p237 = scmp.ne.s32.totalorder %s226, %s227
      %p238 = scmp.eq.s32.totalorder %s22, 0
      %p239 = por %p237, %p238
      %p240 = scmp.ne.s32.totalorder %s226, %s227
      %p241 = scmp.eq.s32.totalorder %s23, 3
      %p242 = por %p240, %p241
      %p244 = scmp.ne.s32.totalorder %s227, %s243
      %p245 = scmp.eq.s32.totalorder %s23, 0
      %p246 = por %p244, %p245
      %p247 = scmp.le.s32.totalorder 1, %s17
      %p248 = scmp.lt.s32.totalorder %s17, 5
      %p249 = pnand %p247, %p248
      %p250 = pneg %p249
      // Predicated region
      $region9: #{_rfa_forward_impl.1} parent=5 // pred_check
        _
      $region10: #{_rfa_forward_impl.1} parent=5 // pred_check_branch
        %252 = sbr.rel (%p249) target = $region12
      $region11: #{_rfa_forward_impl.1} parent=5 // pred_region
        %s253 = ssub.s32 %s17, 1
        // Predicated region
        $region13: #{_rfa_forward_impl.1} parent=11 // pred_check
          %p254 = pneg %p106
        $region14: #{_rfa_forward_impl.1} parent=11 // pred_check_branch
          %256 = sbr.rel (%p254) target = $region16
        $region15: #{_rfa_forward_impl.1} parent=11 // pred_region
          _
        $region16: #{_rfa_forward_impl.1} parent=11 // pred_fallthru
          _
        // Predicated region
        $region17: #{_rfa_forward_impl.1} parent=11 // pred_check
          %p257 = pneg %p127
        $region18: #{_rfa_forward_impl.1} parent=11 // pred_check_branch
          %259 = sbr.rel (%p257) target = $region20
        $region19: #{_rfa_forward_impl.1} parent=11 // pred_region
          _
        $region20: #{_rfa_forward_impl.1} parent=11 // pred_fallthru
          _
        // Predicated region
        $region21: #{_rfa_forward_impl.1} parent=11 // pred_check
          %p260 = pneg %p148
        $region22: #{_rfa_forward_impl.1} parent=11 // pred_check_branch
          %262 = sbr.rel (%p260) target = $region24
        $region23: #{_rfa_forward_impl.1} parent=11 // pred_region
          _
        $region24: #{_rfa_forward_impl.1} parent=11 // pred_fallthru
          _
        // Predicated region
        $region25: #{_rfa_forward_impl.1} parent=11 // pred_check
          %p263 = pneg %p169
        $region26: #{_rfa_forward_impl.1} parent=11 // pred_check_branch
          %265 = sbr.rel (%p263) target = $region28
        $region27: #{_rfa_forward_impl.1} parent=11 // pred_region
          _
        $region28: #{_rfa_forward_impl.1} parent=11 // pred_fallthru
          _
        // Predicated region
        $region29: #{_rfa_forward_impl.1} parent=11 // pred_check
          %p266 = pneg %p190
        $region30: #{_rfa_forward_impl.1} parent=11 // pred_check_branch
          %268 = sbr.rel (%p266) target = $region32
        $region31: #{_rfa_forward_impl.1} parent=11 // pred_region
          _
        $region32: #{_rfa_forward_impl.1} parent=11 // pred_fallthru
          _
        // Predicated region
        $region33: #{_rfa_forward_impl.1} parent=11 // pred_check
          %p269 = pneg %p211
        $region34: #{_rfa_forward_impl.1} parent=11 // pred_check_branch
          %271 = sbr.rel (%p269) target = $region36
        $region35: #{_rfa_forward_impl.1} parent=11 // pred_region
          _
        $region36: #{_rfa_forward_impl.1} parent=11 // pred_fallthru
          _
      $region12: #{_rfa_forward_impl.1} parent=5 // pred_fallthru
        _
      %p272 = scmp.lt.s32.totalorder %s17, 4
      // Predicated region
      $region37: #{_rfa_forward_impl.1} parent=5 // pred_check
        %p273 = pneg %p272
      $region38: #{_rfa_forward_impl.1} parent=5 // pred_check_branch
        %275 = sbr.rel (%p273) target = $region40
      $region39: #{_rfa_forward_impl.1} parent=5 // pred_region
        // Predicated region
        $region41: #{_rfa_forward_impl.1} parent=39 // pred_check
          %p276 = pneg %p51
        $region42: #{_rfa_forward_impl.1} parent=39 // pred_check_branch
          %278 = sbr.rel (%p276) target = $region44
        $region43: #{_rfa_forward_impl.1} parent=39 // pred_region
          %s279 = sand.u32 %s41, 1
          %s280 = sand.u32 %s41, 1
          %s281 = smul.addr %s280, 256
          %s282 = scalar_lea.vmem [#allocation2], %s281
          %s283 = smul.u32 4, %s25
          %s284 = smul.addr %s24, 64
          %s285 = sadd.s32 %s283, %s284
          %s286 = smul.addr %s285, 8
          %s287 = scalar_lea.vmem %s0, %s286
          // Predicated region
          $region45: #{_rfa_forward_impl.1} parent=43 // pred_check
            _
          $region46: #{_rfa_forward_impl.1} parent=43 // pred_check_branch
            %289 = sbr.rel (0) target = $region48
          $region47: #{_rfa_forward_impl.1} parent=43 // pred_region
            // Predicated region
            $region49: #{_rfa_forward_impl.1} parent=47 // pred_check
              _
            $region50: #{_rfa_forward_impl.1} parent=47 // pred_check_branch
              %291 = sbr.rel (0) target = $region52
            $region51: #{_rfa_forward_impl.1} parent=47 // pred_region
              loop: start=0, step=1, limit=1
              $region53: #{_rfa_forward_impl.1} parent=51 // loop_pre_header
                _
              $region54: #{_rfa_forward_impl.1} parent=51 // loop_header
                %s293 = sphi 0, %s297
                %p294 = scmp.ge.s32.totalorder %s293, 1
                %s298 = sphi %s287, %s287
                %s299 = sphi %s282, %s282
              $region55: #{_rfa_forward_impl.1} parent=51 // loop_header_branch
                %296 = sbr.rel (%p294) target = $region59
              $region56: #{_rfa_forward_impl.1} parent=51 // loop_body
                %v300 = vld [vmem:[%s298] sm:$0xff]
                %301 = vst [vmem:[%s299] sm:$0xff] %v300
                %v302 = vld [vmem:[%s298 + $0x8] sm:$0xff]
                %303 = vst [vmem:[%s299 + $0x8] sm:$0xff] %v302
                %v304 = vld [vmem:[%s298 + $0x10] sm:$0xff]
                %305 = vst [vmem:[%s299 + $0x10] sm:$0xff] %v304
                %v306 = vld [vmem:[%s298 + $0x18] sm:$0xff]
                %307 = vst [vmem:[%s299 + $0x18] sm:$0xff] %v306
                %v308 = vld [vmem:[%s298 + $0x40] sm:$0xff]
                %309 = vst [vmem:[%s299 + $0x20] sm:$0xff] %v308
                %v310 = vld [vmem:[%s298 + $0x48] sm:$0xff]
                %311 = vst [vmem:[%s299 + $0x28] sm:$0xff] %v310
                %v312 = vld [vmem:[%s298 + $0x50] sm:$0xff]
                %313 = vst [vmem:[%s299 + $0x30] sm:$0xff] %v312
                %v314 = vld [vmem:[%s298 + $0x58] sm:$0xff]
                %315 = vst [vmem:[%s299 + $0x38] sm:$0xff] %v314
                %v316 = vld [vmem:[%s298 + $0x80] sm:$0xff]
                %317 = vst [vmem:[%s299 + $0x40] sm:$0xff] %v316
                %v318 = vld [vmem:[%s298 + $0x88] sm:$0xff]
                %319 = vst [vmem:[%s299 + $0x48] sm:$0xff] %v318
                %v320 = vld [vmem:[%s298 + $0x90] sm:$0xff]
                %321 = vst [vmem:[%s299 + $0x50] sm:$0xff] %v320
                %v322 = vld [vmem:[%s298 + $0x98] sm:$0xff]
                %323 = vst [vmem:[%s299 + $0x58] sm:$0xff] %v322
                %v324 = vld [vmem:[%s298 + $0xc0] sm:$0xff]
                %325 = vst [vmem:[%s299 + $0x60] sm:$0xff] %v324
                %v326 = vld [vmem:[%s298 + $0xc8] sm:$0xff]
                %327 = vst [vmem:[%s299 + $0x68] sm:$0xff] %v326
                %v328 = vld [vmem:[%s298 + $0xd0] sm:$0xff]
                %329 = vst [vmem:[%s299 + $0x70] sm:$0xff] %v328
                %v330 = vld [vmem:[%s298 + $0xd8] sm:$0xff]
                %331 = vst [vmem:[%s299 + $0x78] sm:$0xff] %v330
                %v332 = vld [vmem:[%s298 + $0x100] sm:$0xff]
                %333 = vst [vmem:[%s299 + $0x80] sm:$0xff] %v332
                %v334 = vld [vmem:[%s298 + $0x108] sm:$0xff]
                %335 = vst [vmem:[%s299 + $0x88] sm:$0xff] %v334
                %v336 = vld [vmem:[%s298 + $0x110] sm:$0xff]
                %337 = vst [vmem:[%s299 + $0x90] sm:$0xff] %v336
                %v338 = vld [vmem:[%s298 + $0x118] sm:$0xff]
                %339 = vst [vmem:[%s299 + $0x98] sm:$0xff] %v338
                %v340 = vld [vmem:[%s298 + $0x140] sm:$0xff]
                %341 = vst [vmem:[%s299 + $0xa0] sm:$0xff] %v340
                %v342 = vld [vmem:[%s298 + $0x148] sm:$0xff]
                %343 = vst [vmem:[%s299 + $0xa8] sm:$0xff] %v342
                %v344 = vld [vmem:[%s298 + $0x150] sm:$0xff]
                %345 = vst [vmem:[%s299 + $0xb0] sm:$0xff] %v344
                %v346 = vld [vmem:[%s298 + $0x158] sm:$0xff]
                %347 = vst [vmem:[%s299 + $0xb8] sm:$0xff] %v346
                %v348 = vld [vmem:[%s298 + $0x180] sm:$0xff]
                %349 = vst [vmem:[%s299 + $0xc0] sm:$0xff] %v348
                %v350 = vld [vmem:[%s298 + $0x188] sm:$0xff]
                %351 = vst [vmem:[%s299 + $0xc8] sm:$0xff] %v350
                %v352 = vld [vmem:[%s298 + $0x190] sm:$0xff]
                %353 = vst [vmem:[%s299 + $0xd0] sm:$0xff] %v352
                %v354 = vld [vmem:[%s298 + $0x198] sm:$0xff]
                %355 = vst [vmem:[%s299 + $0xd8] sm:$0xff] %v354
                %v356 = vld [vmem:[%s298 + $0x1c0] sm:$0xff]
                %357 = vst [vmem:[%s299 + $0xe0] sm:$0xff] %v356
                %v358 = vld [vmem:[%s298 + $0x1c8] sm:$0xff]
                %359 = vst [vmem:[%s299 + $0xe8] sm:$0xff] %v358
                %v360 = vld [vmem:[%s298 + $0x1d0] sm:$0xff]
                %361 = vst [vmem:[%s299 + $0xf0] sm:$0xff] %v360
                %v362 = vld [vmem:[%s298 + $0x1d8] sm:$0xff]
                %363 = vst [vmem:[%s299 + $0xf8] sm:$0xff] %v362
              $region57: #{_rfa_forward_impl.1} parent=51 // loop_footer
                %s297 = sadd.s32 1, %s293
              $region58: #{_rfa_forward_impl.1} parent=51 // loop_footer_branch
                %292 = sbr.rel target = $region54
              $region59: #{_rfa_forward_impl.1} parent=51 // loop_exit
                _
            $region52: #{_rfa_forward_impl.1} parent=47 // pred_fallthru
              _
            // Predicated region
            $region60: #{_rfa_forward_impl.1} parent=47 // pred_check
              _
            $region61: #{_rfa_forward_impl.1} parent=47 // pred_check_branch
              %365 = sbr.rel target = $region63
            $region62: #{_rfa_forward_impl.1} parent=47 // pred_region
              _
            $region63: #{_rfa_forward_impl.1} parent=47 // pred_fallthru
              _
          $region48: #{_rfa_forward_impl.1} parent=43 // pred_fallthru
            _
          %366 = vnop
        $region44: #{_rfa_forward_impl.1} parent=39 // pred_fallthru
          _
        // Predicated region
        $region64: #{_rfa_forward_impl.1} parent=39 // pred_check
          %p367 = pneg %p79
        $region65: #{_rfa_forward_impl.1} parent=39 // pred_check_branch
          %369 = sbr.rel (%p367) target = $region67
        $region66: #{_rfa_forward_impl.1} parent=39 // pred_region
          %s370 = sand.u32 %s69, 1
          %s371 = scalar_lea.sflag [#allocation4], %s370
          %s372 = sand.u32 %s69, 1
          %s373 = smul.addr %s372, 256
          %s374 = scalar_lea.vmem [#allocation3], %s373
          %s375 = smul.u32 4, %s25
          %s377 = ssub.s32 4096, 4096
          %378 = vsyncadd %s371, %s377
          %s379 = smul.addr %s24, 64
          %s380 = sadd.s32 %s375, %s379
          %s381 = smul.addr %s380, 128
          %s382 = scalar_lea.hbm %s1, %s381
          %s383 = sshll.u32 %s374, 4
          %s384 = int_to_ptr.vmem [resolvable:$true] %s383
          %389 = dma.hbm_to_vmem [thread:$0]  %s382, 4096, %s384, %s371, 1024, 512, 32
        $region67: #{_rfa_forward_impl.1} parent=39 // pred_fallthru
          _
      $region40: #{_rfa_forward_impl.1} parent=5 // pred_fallthru
        _
      %p390 = scmp.le.s32.totalorder 1, %s17
      %p391 = scmp.lt.s32.totalorder %s17, 5
      %p392 = pnand %p390, %p391
      %p393 = pneg %p392
      // Predicated region
      $region68: #{_rfa_forward_impl.1} parent=5 // pred_check
        _
      $region69: #{_rfa_forward_impl.1} parent=5 // pred_check_branch
        %395 = sbr.rel (%p392) target = $region71
      $region70: #{_rfa_forward_impl.1} parent=5 // pred_region
        %s396 = ssub.s32 %s17, 1
        %s397 = sand.u32 %s44, 1
        %s398 = sand.u32 %s44, 1
        %s399 = smul.addr %s398, 256
        %s400 = scalar_lea.vmem [#allocation2], %s399
        // Predicated region
        $region72: #{_rfa_forward_impl.1} parent=70 // pred_check
          %p401 = pneg %p57
        $region73: #{_rfa_forward_impl.1} parent=70 // pred_check_branch
          %403 = sbr.rel (%p401) target = $region75
        $region74: #{_rfa_forward_impl.1} parent=70 // pred_region
          _
        $region75: #{_rfa_forward_impl.1} parent=70 // pred_fallthru
          _
        %s404 = sand.u32 %s72, 1
        %s405 = scalar_lea.sflag [#allocation4], %s404
        %s406 = sand.u32 %s72, 1
        %s407 = smul.addr %s406, 256
        %s408 = scalar_lea.vmem [#allocation3], %s407
        // Predicated region
        $region76: #{_rfa_forward_impl.1} parent=70 // pred_check
          %p409 = pneg %p85
        $region77: #{_rfa_forward_impl.1} parent=70 // pred_check_branch
          %411 = sbr.rel (%p409) target = $region79
        $region78: #{_rfa_forward_impl.1} parent=70 // pred_region
          %412 = dma.done %s405, 4096
        $region79: #{_rfa_forward_impl.1} parent=70 // pred_fallthru
          _
        %s413 = sand.u32 %s44, 1
        %s414 = sand.u32 %s44, 1
        %s415 = smul.addr %s414, 256
        %s416 = scalar_lea.vmem [#allocation2], %s415
        %p417 = pneg %p57
        %p418 = pneg %p54
        %s419 = sand.u32 %s72, 1
        %s420 = scalar_lea.sflag [#allocation4], %s419
        %s421 = sand.u32 %s72, 1
        %s422 = smul.addr %s421, 256
        %s423 = scalar_lea.vmem [#allocation3], %s422
        %p424 = pneg %p85
        %p425 = pneg %p82
        %p426 = pneg %p106
        %p427 = pneg %p103
        %p428 = pneg %p127
        %p429 = pneg %p124
        %p430 = pneg %p148
        %p431 = pneg %p145
        %p432 = pneg %p169
        %p433 = pneg %p166
        %p434 = pneg %p190
        %p435 = pneg %p187
        %p436 = pneg %p211
        %p437 = pneg %p208
        %p438 = pneg %p239
        %p439 = pneg %p236
        %s440 = sand.u32 %s226, 1
        %s441 = sand.u32 %s226, 1
        %s442 = smul.addr %s441, 256
        %s443 = scalar_lea.vmem [#allocation5], %s442
        %s444 = smul.u32 4, %s27
        %s445 = smul.u32 4, %s27
        %s446 = smul.u32 4, %s27
        %v448 = vld [vmem:[%s400] sm:$0xff]
        %v449 = vld [vmem:[%s400 + $0x8] sm:$0xff]
        %v450 = vld [vmem:[%s400 + $0x10] sm:$0xff]
        %v451 = vld [vmem:[%s400 + $0x18] sm:$0xff]
        %v452 = vld [vmem:[%s400 + $0x20] sm:$0xff]
        %v453 = vld [vmem:[%s400 + $0x28] sm:$0xff]
        %v454 = vld [vmem:[%s400 + $0x30] sm:$0xff]
        %v455 = vld [vmem:[%s400 + $0x38] sm:$0xff]
        %v456 = vld [vmem:[%s400 + $0x40] sm:$0xff]
        %v457 = vld [vmem:[%s400 + $0x48] sm:$0xff]
        %v458 = vld [vmem:[%s400 + $0x50] sm:$0xff]
        %v459 = vld [vmem:[%s400 + $0x58] sm:$0xff]
        %v460 = vld [vmem:[%s400 + $0x60] sm:$0xff]
        %v461 = vld [vmem:[%s400 + $0x68] sm:$0xff]
        %v462 = vld [vmem:[%s400 + $0x70] sm:$0xff]
        %v463 = vld [vmem:[%s400 + $0x78] sm:$0xff]
        %v464 = vld [vmem:[%s400 + $0x80] sm:$0xff]
        %v465 = vld [vmem:[%s400 + $0x88] sm:$0xff]
        %v466 = vld [vmem:[%s400 + $0x90] sm:$0xff]
        %v467 = vld [vmem:[%s400 + $0x98] sm:$0xff]
        %v468 = vld [vmem:[%s400 + $0xa0] sm:$0xff]
        %v469 = vld [vmem:[%s400 + $0xa8] sm:$0xff]
        %v470 = vld [vmem:[%s400 + $0xb0] sm:$0xff]
        %v471 = vld [vmem:[%s400 + $0xb8] sm:$0xff]
        %v472 = vld [vmem:[%s400 + $0xc0] sm:$0xff]
        %v473 = vld [vmem:[%s400 + $0xc8] sm:$0xff]
        %v474 = vld [vmem:[%s400 + $0xd0] sm:$0xff]
        %v475 = vld [vmem:[%s400 + $0xd8] sm:$0xff]
        %v476 = vld [vmem:[%s400 + $0xe0] sm:$0xff]
        %v477 = vld [vmem:[%s400 + $0xe8] sm:$0xff]
        %v478 = vld [vmem:[%s400 + $0xf0] sm:$0xff]
        %v479 = vld [vmem:[%s400 + $0xf8] sm:$0xff]
        %v480 = vld [vmem:[%s408] sm:$0xff]
        %v481 = vld [vmem:[%s408 + $0x8] sm:$0xff]
        %v482 = vld [vmem:[%s408 + $0x10] sm:$0xff]
        %v483 = vld [vmem:[%s408 + $0x18] sm:$0xff]
        %v484 = vld [vmem:[%s408 + $0x20] sm:$0xff]
        %v485 = vld [vmem:[%s408 + $0x28] sm:$0xff]
        %v486 = vld [vmem:[%s408 + $0x30] sm:$0xff]
        %v487 = vld [vmem:[%s408 + $0x38] sm:$0xff]
        %v488 = vld [vmem:[%s408 + $0x40] sm:$0xff]
        %v489 = vld [vmem:[%s408 + $0x48] sm:$0xff]
        %v490 = vld [vmem:[%s408 + $0x50] sm:$0xff]
        %v491 = vld [vmem:[%s408 + $0x58] sm:$0xff]
        %v492 = vld [vmem:[%s408 + $0x60] sm:$0xff]
        %v493 = vld [vmem:[%s408 + $0x68] sm:$0xff]
        %v494 = vld [vmem:[%s408 + $0x70] sm:$0xff]
        %v495 = vld [vmem:[%s408 + $0x78] sm:$0xff]
        %v496 = vld [vmem:[%s408 + $0x80] sm:$0xff]
        %v497 = vld [vmem:[%s408 + $0x88] sm:$0xff]
        %v498 = vld [vmem:[%s408 + $0x90] sm:$0xff]
        %v499 = vld [vmem:[%s408 + $0x98] sm:$0xff]
        %v500 = vld [vmem:[%s408 + $0xa0] sm:$0xff]
        %v501 = vld [vmem:[%s408 + $0xa8] sm:$0xff]
        %v502 = vld [vmem:[%s408 + $0xb0] sm:$0xff]
        %v503 = vld [vmem:[%s408 + $0xb8] sm:$0xff]
        %v504 = vld [vmem:[%s408 + $0xc0] sm:$0xff]
        %v505 = vld [vmem:[%s408 + $0xc8] sm:$0xff]
        %v506 = vld [vmem:[%s408 + $0xd0] sm:$0xff]
        %v507 = vld [vmem:[%s408 + $0xd8] sm:$0xff]
        %v508 = vld [vmem:[%s408 + $0xe0] sm:$0xff]
        %v509 = vld [vmem:[%s408 + $0xe8] sm:$0xff]
        %v510 = vld [vmem:[%s408 + $0xf0] sm:$0xff]
        %v511 = vld [vmem:[%s408 + $0xf8] sm:$0xff]
        %v512 = vpack.c.bf16 %v452, %v448
        %v513 = vpack.c.bf16 %v453, %v449
        %v514 = vpack.c.bf16 %v454, %v450
        %v515 = vpack.c.bf16 %v455, %v451
        %v516 = vpack.c.bf16 %v460, %v456
        %v517 = vpack.c.bf16 %v461, %v457
        %v518 = vpack.c.bf16 %v462, %v458
        %v519 = vpack.c.bf16 %v463, %v459
        %v520 = vpack.c.bf16 %v468, %v464
        %v521 = vpack.c.bf16 %v469, %v465
        %v522 = vpack.c.bf16 %v470, %v466
        %v523 = vpack.c.bf16 %v471, %v467
        %v524 = vpack.c.bf16 %v476, %v472
        %v525 = vpack.c.bf16 %v477, %v473
        %v526 = vpack.c.bf16 %v478, %v474
        %v527 = vpack.c.bf16 %v479, %v475
        %v528 = vpack.c.bf16 %v484, %v480
        %v529 = vpack.c.bf16 %v485, %v481
        %v530 = vpack.c.bf16 %v486, %v482
        %v531 = vpack.c.bf16 %v487, %v483
        %v532 = vpack.c.bf16 %v492, %v488
        %v533 = vpack.c.bf16 %v493, %v489
        %v534 = vpack.c.bf16 %v494, %v490
        %v535 = vpack.c.bf16 %v495, %v491
        %v536 = vpack.c.bf16 %v500, %v496
        %v537 = vpack.c.bf16 %v501, %v497
        %v538 = vpack.c.bf16 %v502, %v498
        %v539 = vpack.c.bf16 %v503, %v499
        %v540 = vpack.c.bf16 %v508, %v504
        %v541 = vpack.c.bf16 %v509, %v505
        %v542 = vpack.c.bf16 %v510, %v506
        %v543 = vpack.c.bf16 %v511, %v507
        %v544 = vld [vmem:[%s2] sm:$0xf]
        %v545 = vld [vmem:[%s2 + $0x4] sm:$0xf]
        %v546 = vld [vmem:[%s2 + $0x8] sm:$0xf]
        %v547 = vld [vmem:[%s2 + $0xc] sm:$0xf]
        %v548 = vld [vmem:[%s2 + $0x10] sm:$0xf]
        %v549 = vld [vmem:[%s2 + $0x14] sm:$0xf]
        %v550 = vld [vmem:[%s2 + $0x18] sm:$0xf]
        %v551 = vld [vmem:[%s2 + $0x1c] sm:$0xf]
        %v552 = vld [vmem:[%s2 + $0x20] sm:$0xf]
        %v553 = vld [vmem:[%s2 + $0x24] sm:$0xf]
        %v554 = vld [vmem:[%s2 + $0x28] sm:$0xf]
        %v555 = vld [vmem:[%s2 + $0x2c] sm:$0xf]
        %v556 = vld [vmem:[%s2 + $0x30] sm:$0xf]
        %v557 = vld [vmem:[%s2 + $0x34] sm:$0xf]
        %v558 = vld [vmem:[%s2 + $0x38] sm:$0xf]
        %v559 = vld [vmem:[%s2 + $0x3c] sm:$0xf]
        %v560 = vld [vmem:[%s3] sm:$0xf]
        %v561 = vld [vmem:[%s3 + $0x4] sm:$0xf]
        %v562 = vld [vmem:[%s3 + $0x8] sm:$0xf]
        %v563 = vld [vmem:[%s3 + $0xc] sm:$0xf]
        %v564 = vld [vmem:[%s3 + $0x10] sm:$0xf]
        %v565 = vld [vmem:[%s3 + $0x14] sm:$0xf]
        %v566 = vld [vmem:[%s3 + $0x18] sm:$0xf]
        %v567 = vld [vmem:[%s3 + $0x1c] sm:$0xf]
        %v568 = vld [vmem:[%s3 + $0x20] sm:$0xf]
        %v569 = vld [vmem:[%s3 + $0x24] sm:$0xf]
        %v570 = vld [vmem:[%s3 + $0x28] sm:$0xf]
        %v571 = vld [vmem:[%s3 + $0x2c] sm:$0xf]
        %v572 = vld [vmem:[%s3 + $0x30] sm:$0xf]
        %v573 = vld [vmem:[%s3 + $0x34] sm:$0xf]
        %v574 = vld [vmem:[%s3 + $0x38] sm:$0xf]
        %v575 = vld [vmem:[%s3 + $0x3c] sm:$0xf]
        %v592 = vunpack.c.l.b16 %v560
        %v593 = vunpack.c.l.b16 %v561
        %v594 = vunpack.c.l.b16 %v562
        %v595 = vunpack.c.l.b16 %v563
        %v596 = vunpack.c.l.b16 %v564
        %v597 = vunpack.c.l.b16 %v565
        %v598 = vunpack.c.l.b16 %v566
        %v599 = vunpack.c.l.b16 %v567
        %v600 = vunpack.c.l.b16 %v568
        %v601 = vunpack.c.l.b16 %v569
        %v602 = vunpack.c.l.b16 %v570
        %v603 = vunpack.c.l.b16 %v571
        %v604 = vunpack.c.l.b16 %v572
        %v605 = vunpack.c.l.b16 %v573
        %v606 = vunpack.c.l.b16 %v574
        %v607 = vunpack.c.l.b16 %v575
        %v608 = vpack.c.b16 %v593, %v592
        %v609 = vpack.c.b16 %v595, %v594
        %v610 = vpack.c.b16 %v597, %v596
        %v611 = vpack.c.b16 %v599, %v598
        %v612 = vpack.c.b16 %v601, %v600
        %v613 = vpack.c.b16 %v603, %v602
        %v614 = vpack.c.b16 %v605, %v604
        %v615 = vpack.c.b16 %v607, %v606
        %vm616 = vcmask 523264
        %v618 = vsel %vm616, %v608, 0
        %v621 = vsel %vm616, %v609, 0
        %v624 = vsel %vm616, %v610, 0
        %v627 = vsel %vm616, %v611, 0
        %v630 = vsel %vm616, %v612, 0
        %v633 = vsel %vm616, %v613, 0
        %v636 = vsel %vm616, %v614, 0
        %v639 = vsel %vm616, %v615, 0
        %641 = vmatprep.subr.bf16.mxu0 %v529
        %642 = vmatpush1.bf16.msra.mxu0 %v528
        %643 = vmatprep.subr.bf16.mxu0 %v533
        %644 = vmatpush1.bf16.msra.mxu0 %v532
        %645 = vmatprep.subr.bf16.mxu0 %v537
        %646 = vmatpush1.bf16.msra.mxu0 %v536
        %647 = vmatprep.subr.bf16.mxu0 %v541
        %648 = vmatpush1.bf16.msra.mxu0 %v540
        %649 = vmatprep.subr.bf16.mxu0 0
        %650 = vmatpush1.bf16.msra.mxu0 0
        %651 = vmatprep.subr.bf16.mxu0 0
        %652 = vmatpush1.bf16.msra.mxu0 0
        %653 = vmatprep.subr.bf16.mxu0 0
        %654 = vmatpush1.bf16.msra.mxu0 0
        %655 = vmatprep.subr.bf16.mxu0 0
        %656 = vmatpush1.bf16.msra.mxu0 0
        %657 = vmatprep.subr.bf16.mxu0 0
        %658 = vmatpush1.bf16.msra.mxu0 0
        %659 = vmatprep.subr.bf16.mxu0 0
        %660 = vmatpush1.bf16.msra.mxu0 0
        %661 = vmatprep.subr.bf16.mxu0 0
        %662 = vmatpush1.bf16.msra.mxu0 0
        %663 = vmatprep.subr.bf16.mxu0 0
        %664 = vmatpush1.bf16.msra.mxu0 0
        %665 = vmatprep.subr.bf16.mxu0 0
        %666 = vmatpush1.bf16.msra.mxu0 0
        %667 = vmatprep.subr.bf16.mxu0 0
        %668 = vmatpush1.bf16.msra.mxu0 0
        %669 = vmatprep.subr.bf16.mxu0 0
        %670 = vmatpush1.bf16.msra.mxu0 0
        %671 = vmatprep.subr.bf16.mxu0 0
        %672 = vmatpush1.bf16.msra.mxu0 0
        %673 = vmatprep.mubr.bf16.mxu0 0
        %674 = vmatmul.mubr.bf16.gmra.mrb[0].mxu0 %v618
        %v675 = vpop.f32.mrb[0].mxu0
        %v676 = vadd.f32 0.0, %v675
        %v677 = vpop.f32.mrb[0].mxu0
        %v678 = vadd.f32 0.0, %v677
        %v679 = vpop.f32.mrb[0].mxu0
        %v680 = vadd.f32 0.0, %v679
        %v681 = vpop.f32.mrb[0].mxu0
        %v682 = vadd.f32 0.0, %v681
        %683 = vmatprep.mubr.bf16.mxu0 0
        %684 = vmatmul.mubr.bf16.gmra.mrb[0].mxu0 %v621
        %v685 = vpop.f32.mrb[0].mxu0
        %v686 = vadd.f32 0.0, %v685
        %v687 = vpop.f32.mrb[0].mxu0
        %v688 = vadd.f32 0.0, %v687
        %v689 = vpop.f32.mrb[0].mxu0
        %v690 = vadd.f32 0.0, %v689
        %v691 = vpop.f32.mrb[0].mxu0
        %v692 = vadd.f32 0.0, %v691
        %693 = vmatprep.mubr.bf16.mxu0 0
        %694 = vmatmul.mubr.bf16.gmra.mrb[0].mxu0 %v624
        %v695 = vpop.f32.mrb[0].mxu0
        %v696 = vadd.f32 0.0, %v695
        %v697 = vpop.f32.mrb[0].mxu0
        %v698 = vadd.f32 0.0, %v697
        %v699 = vpop.f32.mrb[0].mxu0
        %v700 = vadd.f32 0.0, %v699
        %v701 = vpop.f32.mrb[0].mxu0
        %v702 = vadd.f32 0.0, %v701
        %703 = vmatprep.mubr.bf16.mxu0 0
        %704 = vmatmul.mubr.bf16.gmra.mrb[0].mxu0 %v627
        %v705 = vpop.f32.mrb[0].mxu0
        %v706 = vadd.f32 0.0, %v705
        %v707 = vpop.f32.mrb[0].mxu0
        %v708 = vadd.f32 0.0, %v707
        %v709 = vpop.f32.mrb[0].mxu0
        %v710 = vadd.f32 0.0, %v709
        %v711 = vpop.f32.mrb[0].mxu0
        %v712 = vadd.f32 0.0, %v711
        %713 = vmatprep.mubr.bf16.mxu0 0
        %714 = vmatmul.mubr.bf16.gmra.mrb[0].mxu0 %v630
        %v715 = vpop.f32.mrb[0].mxu0
        %v716 = vadd.f32 0.0, %v715
        %v717 = vpop.f32.mrb[0].mxu0
        %v718 = vadd.f32 0.0, %v717
        %v719 = vpop.f32.mrb[0].mxu0
        %v720 = vadd.f32 0.0, %v719
        %v721 = vpop.f32.mrb[0].mxu0
        %v722 = vadd.f32 0.0, %v721
        %723 = vmatprep.mubr.bf16.mxu0 0
        %724 = vmatmul.mubr.bf16.gmra.mrb[0].mxu0 %v633
        %v725 = vpop.f32.mrb[0].mxu0
        %v726 = vadd.f32 0.0, %v725
        %v727 = vpop.f32.mrb[0].mxu0
        %v728 = vadd.f32 0.0, %v727
        %v729 = vpop.f32.mrb[0].mxu0
        %v730 = vadd.f32 0.0, %v729
        %v731 = vpop.f32.mrb[0].mxu0
        %v732 = vadd.f32 0.0, %v731
        %733 = vmatprep.mubr.bf16.mxu0 0
        %734 = vmatmul.mubr.bf16.gmra.mrb[0].mxu0 %v636
        %v735 = vpop.f32.mrb[0].mxu0
        %v736 = vadd.f32 0.0, %v735
        %v737 = vpop.f32.mrb[0].mxu0
        %v738 = vadd.f32 0.0, %v737
        %v739 = vpop.f32.mrb[0].mxu0
        %v740 = vadd.f32 0.0, %v739
        %v741 = vpop.f32.mrb[0].mxu0
        %v742 = vadd.f32 0.0, %v741
        %743 = vmatprep.mubr.bf16.mxu0 0
        %744 = vmatmul.mubr.bf16.gmra.mrb[0].mxu0 %v639
        %v745 = vpop.f32.mrb[0].mxu0
        %v746 = vadd.f32 0.0, %v745
        %v747 = vpop.f32.mrb[0].mxu0
        %v748 = vadd.f32 0.0, %v747
        %v749 = vpop.f32.mrb[0].mxu0
        %v750 = vadd.f32 0.0, %v749
        %v751 = vpop.f32.mrb[0].mxu0
        %v752 = vadd.f32 0.0, %v751
        %753 = vdwg.mxu0
        %754 = vmatprep.subr.bf16.mxu0 %v531
        %755 = vmatpush1.bf16.msra.mxu0 %v530
        %756 = vmatprep.subr.bf16.mxu0 %v535
        %757 = vmatpush1.bf16.msra.mxu0 %v534
        %758 = vmatprep.subr.bf16.mxu0 %v539
        %759 = vmatpush1.bf16.msra.mxu0 %v538
        %760 = vmatprep.subr.bf16.mxu0 %v543
        %761 = vmatpush1.bf16.msra.mxu0 %v542
        %762 = vmatprep.subr.bf16.mxu0 0
        %763 = vmatpush1.bf16.msra.mxu0 0
        %764 = vmatprep.subr.bf16.mxu0 0
        %765 = vmatpush1.bf16.msra.mxu0 0
        %766 = vmatprep.subr.bf16.mxu0 0
        %767 = vmatpush1.bf16.msra.mxu0 0
        %768 = vmatprep.subr.bf16.mxu0 0
        %769 = vmatpush1.bf16.msra.mxu0 0
        %770 = vmatprep.subr.bf16.mxu0 0
        %771 = vmatpush1.bf16.msra.mxu0 0
        %772 = vmatprep.subr.bf16.mxu0 0
        %773 = vmatpush1.bf16.msra.mxu0 0
        %774 = vmatprep.subr.bf16.mxu0 0
        %775 = vmatpush1.bf16.msra.mxu0 0
        %776 = vmatprep.subr.bf16.mxu0 0
        %777 = vmatpush1.bf16.msra.mxu0 0
        %778 = vmatprep.subr.bf16.mxu0 0
        %779 = vmatpush1.bf16.msra.mxu0 0
        %780 = vmatprep.subr.bf16.mxu0 0
        %781 = vmatpush1.bf16.msra.mxu0 0
        %782 = vmatprep.subr.bf16.mxu0 0
        %783 = vmatpush1.bf16.msra.mxu0 0
        %784 = vmatprep.subr.bf16.mxu0 0
        %785 = vmatpush1.bf16.msra.mxu0 0
        %786 = vmatprep.mubr.bf16.mxu0 0
        %787 = vmatmul.mubr.bf16.gmra.mrb[0].mxu0 %v618
        %v788 = vpop.f32.mrb[0].mxu0
        %v789 = vadd.f32 0.0, %v788
        %v790 = vpop.f32.mrb[0].mxu0
        %v791 = vadd.f32 0.0, %v790
        %v792 = vpop.f32.mrb[0].mxu0
        %v793 = vadd.f32 0.0, %v792
        %v794 = vpop.f32.mrb[0].mxu0
        %v795 = vadd.f32 0.0, %v794
        %796 = vmatprep.mubr.bf16.mxu0 0
        %797 = vmatmul.mubr.bf16.gmra.mrb[0].mxu0 %v621
        %v798 = vpop.f32.mrb[0].mxu0
        %v799 = vadd.f32 0.0, %v798
        %v800 = vpop.f32.mrb[0].mxu0
        %v801 = vadd.f32 0.0, %v800
        %v802 = vpop.f32.mrb[0].mxu0
        %v803 = vadd.f32 0.0, %v802
        %v804 = vpop.f32.mrb[0].mxu0
        %v805 = vadd.f32 0.0, %v804
        %806 = vmatprep.mubr.bf16.mxu0 0
        %807 = vmatmul.mubr.bf16.gmra.mrb[0].mxu0 %v624
        %v808 = vpop.f32.mrb[0].mxu0
        %v809 = vadd.f32 0.0, %v808
        %v810 = vpop.f32.mrb[0].mxu0
        %v811 = vadd.f32 0.0, %v810
        %v812 = vpop.f32.mrb[0].mxu0
        %v813 = vadd.f32 0.0, %v812
        %v814 = vpop.f32.mrb[0].mxu0
        %v815 = vadd.f32 0.0, %v814
        %816 = vmatprep.mubr.bf16.mxu0 0
        %817 = vmatmul.mubr.bf16.gmra.mrb[0].mxu0 %v627
        %v818 = vpop.f32.mrb[0].mxu0
        %v819 = vadd.f32 0.0, %v818
        %v820 = vpop.f32.mrb[0].mxu0
        %v821 = vadd.f32 0.0, %v820
        %v822 = vpop.f32.mrb[0].mxu0
        %v823 = vadd.f32 0.0, %v822
        %v824 = vpop.f32.mrb[0].mxu0
        %v825 = vadd.f32 0.0, %v824
        %826 = vmatprep.mubr.bf16.mxu0 0
        %827 = vmatmul.mubr.bf16.gmra.mrb[0].mxu0 %v630
        %v828 = vpop.f32.mrb[0].mxu0
        %v829 = vadd.f32 0.0, %v828
        %v830 = vpop.f32.mrb[0].mxu0
        %v831 = vadd.f32 0.0, %v830
        %v832 = vpop.f32.mrb[0].mxu0
        %v833 = vadd.f32 0.0, %v832
        %v834 = vpop.f32.mrb[0].mxu0
        %v835 = vadd.f32 0.0, %v834
        %836 = vmatprep.mubr.bf16.mxu0 0
        %837 = vmatmul.mubr.bf16.gmra.mrb[0].mxu0 %v633
        %v838 = vpop.f32.mrb[0].mxu0
        %v839 = vadd.f32 0.0, %v838
        %v840 = vpop.f32.mrb[0].mxu0
        %v841 = vadd.f32 0.0, %v840
        %v842 = vpop.f32.mrb[0].mxu0
        %v843 = vadd.f32 0.0, %v842
        %v844 = vpop.f32.mrb[0].mxu0
        %v845 = vadd.f32 0.0, %v844
        %846 = vmatprep.mubr.bf16.mxu0 0
        %847 = vmatmul.mubr.bf16.gmra.mrb[0].mxu0 %v636
        %v848 = vpop.f32.mrb[0].mxu0
        %v849 = vadd.f32 0.0, %v848
        %v850 = vpop.f32.mrb[0].mxu0
        %v851 = vadd.f32 0.0, %v850
        %v852 = vpop.f32.mrb[0].mxu0
        %v853 = vadd.f32 0.0, %v852
        %v854 = vpop.f32.mrb[0].mxu0
        %v855 = vadd.f32 0.0, %v854
        %856 = vmatprep.mubr.bf16.mxu0 0
        %857 = vmatmul.mubr.bf16.gmra.mrb[0].mxu0 %v639
        %v858 = vpop.f32.mrb[0].mxu0
        %v859 = vadd.f32 0.0, %v858
        %v860 = vpop.f32.mrb[0].mxu0
        %v861 = vadd.f32 0.0, %v860
        %v862 = vpop.f32.mrb[0].mxu0
        %v863 = vadd.f32 0.0, %v862
        %v864 = vpop.f32.mrb[0].mxu0
        %v865 = vadd.f32 0.0, %v864
        %866 = vdwg.mxu0
        %v883 = vunpack.c.l.b16 %v544
        %v884 = vunpack.c.l.b16 %v545
        %v885 = vunpack.c.l.b16 %v546
        %v886 = vunpack.c.l.b16 %v547
        %v887 = vunpack.c.l.b16 %v548
        %v888 = vunpack.c.l.b16 %v549
        %v889 = vunpack.c.l.b16 %v550
        %v890 = vunpack.c.l.b16 %v551
        %v891 = vunpack.c.l.b16 %v552
        %v892 = vunpack.c.l.b16 %v553
        %v893 = vunpack.c.l.b16 %v554
        %v894 = vunpack.c.l.b16 %v555
        %v895 = vunpack.c.l.b16 %v556
        %v896 = vunpack.c.l.b16 %v557
        %v897 = vunpack.c.l.b16 %v558
        %v898 = vunpack.c.l.b16 %v559
        %v899 = vpack.c.b16 %v884, %v883
        %v900 = vpack.c.b16 %v886, %v885
        %v901 = vpack.c.b16 %v888, %v887
        %v902 = vpack.c.b16 %v890, %v889
        %v903 = vpack.c.b16 %v892, %v891
        %v904 = vpack.c.b16 %v894, %v893
        %v905 = vpack.c.b16 %v896, %v895
        %v906 = vpack.c.b16 %v898, %v897
        %v908 = vsel %vm616, %v899, 0
        %v911 = vsel %vm616, %v900, 0
        %v914 = vsel %vm616, %v901, 0
        %v917 = vsel %vm616, %v902, 0
        %v920 = vsel %vm616, %v903, 0
        %v923 = vsel %vm616, %v904, 0
        %v926 = vsel %vm616, %v905, 0
        %v929 = vsel %vm616, %v906, 0
        %931 = vmatprep.subr.bf16.mxu0 %v513
        %932 = vmatpush1.bf16.msra.mxu0 %v512
        %933 = vmatprep.subr.bf16.mxu0 %v517
        %934 = vmatpush1.bf16.msra.mxu0 %v516
        %935 = vmatprep.subr.bf16.mxu0 %v521
        %936 = vmatpush1.bf16.msra.mxu0 %v520
        %937 = vmatprep.subr.bf16.mxu0 %v525
        %938 = vmatpush1.bf16.msra.mxu0 %v524
        %939 = vmatprep.subr.bf16.mxu0 0
        %940 = vmatpush1.bf16.msra.mxu0 0
        %941 = vmatprep.subr.bf16.mxu0 0
        %942 = vmatpush1.bf16.msra.mxu0 0
        %943 = vmatprep.subr.bf16.mxu0 0
        %944 = vmatpush1.bf16.msra.mxu0 0
        %945 = vmatprep.subr.bf16.mxu0 0
        %946 = vmatpush1.bf16.msra.mxu0 0
        %947 = vmatprep.subr.bf16.mxu0 0
        %948 = vmatpush1.bf16.msra.mxu0 0
        %949 = vmatprep.subr.bf16.mxu0 0
        %950 = vmatpush1.bf16.msra.mxu0 0
        %951 = vmatprep.subr.bf16.mxu0 0
        %952 = vmatpush1.bf16.msra.mxu0 0
        %953 = vmatprep.subr.bf16.mxu0 0
        %954 = vmatpush1.bf16.msra.mxu0 0
        %955 = vmatprep.subr.bf16.mxu0 0
        %956 = vmatpush1.bf16.msra.mxu0 0
        %957 = vmatprep.subr.bf16.mxu0 0
        %958 = vmatpush1.bf16.msra.mxu0 0
        %959 = vmatprep.subr.bf16.mxu0 0
        %960 = vmatpush1.bf16.msra.mxu0 0
        %961 = vmatprep.subr.bf16.mxu0 0
        %962 = vmatpush1.bf16.msra.mxu0 0
        %963 = vmatprep.mubr.bf16.mxu0 0
        %964 = vmatmul.mubr.bf16.gmra.mrb[0].mxu0 %v908
        %v965 = vpop.f32.mrb[0].mxu0
        %v966 = vadd.f32 %v676, %v965
        %v967 = vpop.f32.mrb[0].mxu0
        %v968 = vadd.f32 %v678, %v967
        %v969 = vpop.f32.mrb[0].mxu0
        %v970 = vadd.f32 %v680, %v969
        %v971 = vpop.f32.mrb[0].mxu0
        %v972 = vadd.f32 %v682, %v971
        %973 = vmatprep.mubr.bf16.mxu0 0
        %974 = vmatmul.mubr.bf16.gmra.mrb[0].mxu0 %v911
        %v975 = vpop.f32.mrb[0].mxu0
        %v976 = vadd.f32 %v686, %v975
        %v977 = vpop.f32.mrb[0].mxu0
        %v978 = vadd.f32 %v688, %v977
        %v979 = vpop.f32.mrb[0].mxu0
        %v980 = vadd.f32 %v690, %v979
        %v981 = vpop.f32.mrb[0].mxu0
        %v982 = vadd.f32 %v692, %v981
        %983 = vmatprep.mubr.bf16.mxu0 0
        %984 = vmatmul.mubr.bf16.gmra.mrb[0].mxu0 %v914
        %v985 = vpop.f32.mrb[0].mxu0
        %v986 = vadd.f32 %v696, %v985
        %v987 = vpop.f32.mrb[0].mxu0
        %v988 = vadd.f32 %v698, %v987
        %v989 = vpop.f32.mrb[0].mxu0
        %v990 = vadd.f32 %v700, %v989
        %v991 = vpop.f32.mrb[0].mxu0
        %v992 = vadd.f32 %v702, %v991
        %993 = vmatprep.mubr.bf16.mxu0 0
        %994 = vmatmul.mubr.bf16.gmra.mrb[0].mxu0 %v917
        %v995 = vpop.f32.mrb[0].mxu0
        %v996 = vadd.f32 %v706, %v995
        %v997 = vpop.f32.mrb[0].mxu0
        %v998 = vadd.f32 %v708, %v997
        %v999 = vpop.f32.mrb[0].mxu0
        %v1000 = vadd.f32 %v710, %v999
        %v1001 = vpop.f32.mrb[0].mxu0
        %v1002 = vadd.f32 %v712, %v1001
        %1003 = vmatprep.mubr.bf16.mxu0 0
        %1004 = vmatmul.mubr.bf16.gmra.mrb[0].mxu0 %v920
        %v1005 = vpop.f32.mrb[0].mxu0
        %v1006 = vadd.f32 %v716, %v1005
        %v1007 = vpop.f32.mrb[0].mxu0
        %v1008 = vadd.f32 %v718, %v1007
        %v1009 = vpop.f32.mrb[0].mxu0
        %v1010 = vadd.f32 %v720, %v1009
        %v1011 = vpop.f32.mrb[0].mxu0
        %v1012 = vadd.f32 %v722, %v1011
        %1013 = vmatprep.mubr.bf16.mxu0 0
        %1014 = vmatmul.mubr.bf16.gmra.mrb[0].mxu0 %v923
        %v1015 = vpop.f32.mrb[0].mxu0
        %v1016 = vadd.f32 %v726, %v1015
        %v1017 = vpop.f32.mrb[0].mxu0
        %v1018 = vadd.f32 %v728, %v1017
        %v1019 = vpop.f32.mrb[0].mxu0
        %v1020 = vadd.f32 %v730, %v1019
        %v1021 = vpop.f32.mrb[0].mxu0
        %v1022 = vadd.f32 %v732, %v1021
        %1023 = vmatprep.mubr.bf16.mxu0 0
        %1024 = vmatmul.mubr.bf16.gmra.mrb[0].mxu0 %v926
        %v1025 = vpop.f32.mrb[0].mxu0
        %v1026 = vadd.f32 %v736, %v1025
        %v1027 = vpop.f32.mrb[0].mxu0
        %v1028 = vadd.f32 %v738, %v1027
        %v1029 = vpop.f32.mrb[0].mxu0
        %v1030 = vadd.f32 %v740, %v1029
        %v1031 = vpop.f32.mrb[0].mxu0
        %v1032 = vadd.f32 %v742, %v1031
        %1033 = vmatprep.mubr.bf16.mxu0 0
        %1034 = vmatmul.mubr.bf16.gmra.mrb[0].mxu0 %v929
        %v1035 = vpop.f32.mrb[0].mxu0
        %v1036 = vadd.f32 %v746, %v1035
        %v1037 = vpop.f32.mrb[0].mxu0
        %v1038 = vadd.f32 %v748, %v1037
        %v1039 = vpop.f32.mrb[0].mxu0
        %v1040 = vadd.f32 %v750, %v1039
        %v1041 = vpop.f32.mrb[0].mxu0
        %v1042 = vadd.f32 %v752, %v1041
        %1043 = vdwg.mxu0
        %1044 = vmatprep.subr.bf16.mxu0 %v515
        %1045 = vmatpush1.bf16.msra.mxu0 %v514
        %1046 = vmatprep.subr.bf16.mxu0 %v519
        %1047 = vmatpush1.bf16.msra.mxu0 %v518
        %1048 = vmatprep.subr.bf16.mxu0 %v523
        %1049 = vmatpush1.bf16.msra.mxu0 %v522
        %1050 = vmatprep.subr.bf16.mxu0 %v527
        %1051 = vmatpush1.bf16.msra.mxu0 %v526
        %1052 = vmatprep.subr.bf16.mxu0 0
        %1053 = vmatpush1.bf16.msra.mxu0 0
        %1054 = vmatprep.subr.bf16.mxu0 0
        %1055 = vmatpush1.bf16.msra.mxu0 0
        %1056 = vmatprep.subr.bf16.mxu0 0
        %1057 = vmatpush1.bf16.msra.mxu0 0
        %1058 = vmatprep.subr.bf16.mxu0 0
        %1059 = vmatpush1.bf16.msra.mxu0 0
        %1060 = vmatprep.subr.bf16.mxu0 0
        %1061 = vmatpush1.bf16.msra.mxu0 0
        %1062 = vmatprep.subr.bf16.mxu0 0
        %1063 = vmatpush1.bf16.msra.mxu0 0
        %1064 = vmatprep.subr.bf16.mxu0 0
        %1065 = vmatpush1.bf16.msra.mxu0 0
        %1066 = vmatprep.subr.bf16.mxu0 0
        %1067 = vmatpush1.bf16.msra.mxu0 0
        %1068 = vmatprep.subr.bf16.mxu0 0
        %1069 = vmatpush1.bf16.msra.mxu0 0
        %1070 = vmatprep.subr.bf16.mxu0 0
        %1071 = vmatpush1.bf16.msra.mxu0 0
        %1072 = vmatprep.subr.bf16.mxu0 0
        %1073 = vmatpush1.bf16.msra.mxu0 0
        %1074 = vmatprep.subr.bf16.mxu0 0
        %1075 = vmatpush1.bf16.msra.mxu0 0
        %1076 = vmatprep.mubr.bf16.mxu0 0
        %1077 = vmatmul.mubr.bf16.gmra.mrb[0].mxu0 %v908
        %v1078 = vpop.f32.mrb[0].mxu0
        %v1079 = vadd.f32 %v789, %v1078
        %v1080 = vpop.f32.mrb[0].mxu0
        %v1081 = vadd.f32 %v791, %v1080
        %v1082 = vpop.f32.mrb[0].mxu0
        %v1083 = vadd.f32 %v793, %v1082
        %v1084 = vpop.f32.mrb[0].mxu0
        %v1085 = vadd.f32 %v795, %v1084
        %1086 = vmatprep.mubr.bf16.mxu0 0
        %1087 = vmatmul.mubr.bf16.gmra.mrb[0].mxu0 %v911
        %v1088 = vpop.f32.mrb[0].mxu0
        %v1089 = vadd.f32 %v799, %v1088
        %v1090 = vpop.f32.mrb[0].mxu0
        %v1091 = vadd.f32 %v801, %v1090
        %v1092 = vpop.f32.mrb[0].mxu0
        %v1093 = vadd.f32 %v803, %v1092
        %v1094 = vpop.f32.mrb[0].mxu0
        %v1095 = vadd.f32 %v805, %v1094
        %1096 = vmatprep.mubr.bf16.mxu0 0
        %1097 = vmatmul.mubr.bf16.gmra.mrb[0].mxu0 %v914
        %v1098 = vpop.f32.mrb[0].mxu0
        %v1099 = vadd.f32 %v809, %v1098
        %v1100 = vpop.f32.mrb[0].mxu0
        %v1101 = vadd.f32 %v811, %v1100
        %v1102 = vpop.f32.mrb[0].mxu0
        %v1103 = vadd.f32 %v813, %v1102
        %v1104 = vpop.f32.mrb[0].mxu0
        %v1105 = vadd.f32 %v815, %v1104
        %1106 = vmatprep.mubr.bf16.mxu0 0
        %1107 = vmatmul.mubr.bf16.gmra.mrb[0].mxu0 %v917
        %v1108 = vpop.f32.mrb[0].mxu0
        %v1109 = vadd.f32 %v819, %v1108
        %v1110 = vpop.f32.mrb[0].mxu0
        %v1111 = vadd.f32 %v821, %v1110
        %v1112 = vpop.f32.mrb[0].mxu0
        %v1113 = vadd.f32 %v823, %v1112
        %v1114 = vpop.f32.mrb[0].mxu0
        %v1115 = vadd.f32 %v825, %v1114
        %1116 = vmatprep.mubr.bf16.mxu0 0
        %1117 = vmatmul.mubr.bf16.gmra.mrb[0].mxu0 %v920
        %v1118 = vpop.f32.mrb[0].mxu0
        %v1119 = vadd.f32 %v829, %v1118
        %v1120 = vpop.f32.mrb[0].mxu0
        %v1121 = vadd.f32 %v831, %v1120
        %v1122 = vpop.f32.mrb[0].mxu0
        %v1123 = vadd.f32 %v833, %v1122
        %v1124 = vpop.f32.mrb[0].mxu0
        %v1125 = vadd.f32 %v835, %v1124
        %1126 = vmatprep.mubr.bf16.mxu0 0
        %1127 = vmatmul.mubr.bf16.gmra.mrb[0].mxu0 %v923
        %v1128 = vpop.f32.mrb[0].mxu0
        %v1129 = vadd.f32 %v839, %v1128
        %v1130 = vpop.f32.mrb[0].mxu0
        %v1131 = vadd.f32 %v841, %v1130
        %v1132 = vpop.f32.mrb[0].mxu0
        %v1133 = vadd.f32 %v843, %v1132
        %v1134 = vpop.f32.mrb[0].mxu0
        %v1135 = vadd.f32 %v845, %v1134
        %1136 = vmatprep.mubr.bf16.mxu0 0
        %1137 = vmatmul.mubr.bf16.gmra.mrb[0].mxu0 %v926
        %v1138 = vpop.f32.mrb[0].mxu0
        %v1139 = vadd.f32 %v849, %v1138
        %v1140 = vpop.f32.mrb[0].mxu0
        %v1141 = vadd.f32 %v851, %v1140
        %v1142 = vpop.f32.mrb[0].mxu0
        %v1143 = vadd.f32 %v853, %v1142
        %v1144 = vpop.f32.mrb[0].mxu0
        %v1145 = vadd.f32 %v855, %v1144
        %1146 = vmatprep.mubr.bf16.mxu0 0
        %1147 = vmatmul.mubr.bf16.gmra.mrb[0].mxu0 %v929
        %v1148 = vpop.f32.mrb[0].mxu0
        %v1149 = vadd.f32 %v859, %v1148
        %v1150 = vpop.f32.mrb[0].mxu0
        %v1151 = vadd.f32 %v861, %v1150
        %v1152 = vpop.f32.mrb[0].mxu0
        %v1153 = vadd.f32 %v863, %v1152
        %v1154 = vpop.f32.mrb[0].mxu0
        %v1155 = vadd.f32 %v865, %v1154
        %1156 = vdwg.mxu0
        %v1157 = vld [vmem:[%s6] sm:$0xff]
        %v1158 = vld [vmem:[%s6 + $0x8] sm:$0xff]
        %v1159 = vld [vmem:[%s6 + $0x10] sm:$0xff]
        %v1160 = vld [vmem:[%s6 + $0x18] sm:$0xff]
        %v1161 = vld [vmem:[%s6 + $0x20] sm:$0xff]
        %v1162 = vld [vmem:[%s6 + $0x28] sm:$0xff]
        %v1163 = vld [vmem:[%s6 + $0x30] sm:$0xff]
        %v1164 = vld [vmem:[%s6 + $0x38] sm:$0xff]
        %v1165 = vld [vmem:[%s6 + $0x40] sm:$0xff]
        %v1166 = vld [vmem:[%s6 + $0x48] sm:$0xff]
        %v1167 = vld [vmem:[%s6 + $0x50] sm:$0xff]
        %v1168 = vld [vmem:[%s6 + $0x58] sm:$0xff]
        %v1169 = vld [vmem:[%s6 + $0x60] sm:$0xff]
        %v1170 = vld [vmem:[%s6 + $0x68] sm:$0xff]
        %v1171 = vld [vmem:[%s6 + $0x70] sm:$0xff]
        %v1172 = vld [vmem:[%s6 + $0x78] sm:$0xff]
        %1174 = vset.pattern.permute.xlu0 0
        %1175 = vperm.xlu0 %1174, %v1157
        %v1176 = vpop.permute.xlu0 %1175
        %1179 = vset.pattern.permute.xlu0 0
        %1180 = vperm.xlu0 %1179, %v1158
        %v1181 = vpop.permute.xlu0 %1180
        %1184 = vset.pattern.permute.xlu0 0
        %1185 = vperm.xlu0 %1184, %v1159
        %v1186 = vpop.permute.xlu0 %1185
        %1189 = vset.pattern.permute.xlu0 0
        %1190 = vperm.xlu0 %1189, %v1160
        %v1191 = vpop.permute.xlu0 %1190
        %1194 = vset.pattern.permute.xlu0 0
        %1195 = vperm.xlu0 %1194, %v1161
        %v1196 = vpop.permute.xlu0 %1195
        %1199 = vset.pattern.permute.xlu0 0
        %1200 = vperm.xlu0 %1199, %v1162
        %v1201 = vpop.permute.xlu0 %1200
        %1204 = vset.pattern.permute.xlu0 0
        %1205 = vperm.xlu0 %1204, %v1163
        %v1206 = vpop.permute.xlu0 %1205
        %1209 = vset.pattern.permute.xlu0 0
        %1210 = vperm.xlu0 %1209, %v1164
        %v1211 = vpop.permute.xlu0 %1210
        %1214 = vset.pattern.permute.xlu0 0
        %1215 = vperm.xlu0 %1214, %v1165
        %v1216 = vpop.permute.xlu0 %1215
        %1219 = vset.pattern.permute.xlu0 0
        %1220 = vperm.xlu0 %1219, %v1166
        %v1221 = vpop.permute.xlu0 %1220
        %1224 = vset.pattern.permute.xlu0 0
        %1225 = vperm.xlu0 %1224, %v1167
        %v1226 = vpop.permute.xlu0 %1225
        %1229 = vset.pattern.permute.xlu0 0
        %1230 = vperm.xlu0 %1229, %v1168
        %v1231 = vpop.permute.xlu0 %1230
        %1234 = vset.pattern.permute.xlu0 0
        %1235 = vperm.xlu0 %1234, %v1169
        %v1236 = vpop.permute.xlu0 %1235
        %1239 = vset.pattern.permute.xlu0 0
        %1240 = vperm.xlu0 %1239, %v1170
        %v1241 = vpop.permute.xlu0 %1240
        %1244 = vset.pattern.permute.xlu0 0
        %1245 = vperm.xlu0 %1244, %v1171
        %v1246 = vpop.permute.xlu0 %1245
        %1249 = vset.pattern.permute.xlu0 0
        %1250 = vperm.xlu0 %1249, %v1172
        %v1251 = vpop.permute.xlu0 %1250
        %v1253 = vadd.f32 %v966, %v1176
        %v1254 = vadd.f32 %v968, %v1176
        %v1255 = vadd.f32 %v1079, %v1176
        %v1256 = vadd.f32 %v1081, %v1176
        %v1257 = vadd.f32 %v970, %v1181
        %v1258 = vadd.f32 %v972, %v1181
        %v1259 = vadd.f32 %v1083, %v1181
        %v1260 = vadd.f32 %v1085, %v1181
        %v1261 = vadd.f32 %v976, %v1186
        %v1262 = vadd.f32 %v978, %v1186
        %v1263 = vadd.f32 %v1089, %v1186
        %v1264 = vadd.f32 %v1091, %v1186
        %v1265 = vadd.f32 %v980, %v1191
        %v1266 = vadd.f32 %v982, %v1191
        %v1267 = vadd.f32 %v1093, %v1191
        %v1268 = vadd.f32 %v1095, %v1191
        %v1269 = vadd.f32 %v986, %v1196
        %v1270 = vadd.f32 %v988, %v1196
        %v1271 = vadd.f32 %v1099, %v1196
        %v1272 = vadd.f32 %v1101, %v1196
        %v1273 = vadd.f32 %v990, %v1201
        %v1274 = vadd.f32 %v992, %v1201
        %v1275 = vadd.f32 %v1103, %v1201
        %v1276 = vadd.f32 %v1105, %v1201
        %v1277 = vadd.f32 %v996, %v1206
        %v1278 = vadd.f32 %v998, %v1206
        %v1279 = vadd.f32 %v1109, %v1206
        %v1280 = vadd.f32 %v1111, %v1206
        %v1281 = vadd.f32 %v1000, %v1211
        %v1282 = vadd.f32 %v1002, %v1211
        %v1283 = vadd.f32 %v1113, %v1211
        %v1284 = vadd.f32 %v1115, %v1211
        %v1285 = vadd.f32 %v1006, %v1216
        %v1286 = vadd.f32 %v1008, %v1216
        %v1287 = vadd.f32 %v1119, %v1216
        %v1288 = vadd.f32 %v1121, %v1216
        %v1289 = vadd.f32 %v1010, %v1221
        %v1290 = vadd.f32 %v1012, %v1221
        %v1291 = vadd.f32 %v1123, %v1221
        %v1292 = vadd.f32 %v1125, %v1221
        %v1293 = vadd.f32 %v1016, %v1226
        %v1294 = vadd.f32 %v1018, %v1226
        %v1295 = vadd.f32 %v1129, %v1226
        %v1296 = vadd.f32 %v1131, %v1226
        %v1297 = vadd.f32 %v1020, %v1231
        %v1298 = vadd.f32 %v1022, %v1231
        %v1299 = vadd.f32 %v1133, %v1231
        %v1300 = vadd.f32 %v1135, %v1231
        %v1301 = vadd.f32 %v1026, %v1236
        %v1302 = vadd.f32 %v1028, %v1236
        %v1303 = vadd.f32 %v1139, %v1236
        %v1304 = vadd.f32 %v1141, %v1236
        %v1305 = vadd.f32 %v1030, %v1241
        %v1306 = vadd.f32 %v1032, %v1241
        %v1307 = vadd.f32 %v1143, %v1241
        %v1308 = vadd.f32 %v1145, %v1241
        %v1309 = vadd.f32 %v1036, %v1246
        %v1310 = vadd.f32 %v1038, %v1246
        %v1311 = vadd.f32 %v1149, %v1246
        %v1312 = vadd.f32 %v1151, %v1246
        %v1313 = vadd.f32 %v1040, %v1251
        %v1314 = vadd.f32 %v1042, %v1251
        %v1315 = vadd.f32 %v1153, %v1251
        %v1316 = vadd.f32 %v1155, %v1251
        %v1317 = vxor.u32 %v1253, 2147483648
        %v1318 = vxor.u32 %v1254, 2147483648
        %v1319 = vxor.u32 %v1255, 2147483648
        %v1320 = vxor.u32 %v1256, 2147483648
        %v1321 = vxor.u32 %v1257, 2147483648
        %v1322 = vxor.u32 %v1258, 2147483648
        %v1323 = vxor.u32 %v1259, 2147483648
        %v1324 = vxor.u32 %v1260, 2147483648
        %v1325 = vxor.u32 %v1261, 2147483648
        %v1326 = vxor.u32 %v1262, 2147483648
        %v1327 = vxor.u32 %v1263, 2147483648
        %v1328 = vxor.u32 %v1264, 2147483648
        %v1329 = vxor.u32 %v1265, 2147483648
        %v1330 = vxor.u32 %v1266, 2147483648
        %v1331 = vxor.u32 %v1267, 2147483648
        %v1332 = vxor.u32 %v1268, 2147483648
        %v1333 = vxor.u32 %v1269, 2147483648
        %v1334 = vxor.u32 %v1270, 2147483648
        %v1335 = vxor.u32 %v1271, 2147483648
        %v1336 = vxor.u32 %v1272, 2147483648
        %v1337 = vxor.u32 %v1273, 2147483648
        %v1338 = vxor.u32 %v1274, 2147483648
        %v1339 = vxor.u32 %v1275, 2147483648
        %v1340 = vxor.u32 %v1276, 2147483648
        %v1341 = vxor.u32 %v1277, 2147483648
        %v1342 = vxor.u32 %v1278, 2147483648
        %v1343 = vxor.u32 %v1279, 2147483648
        %v1344 = vxor.u32 %v1280, 2147483648
        %v1345 = vxor.u32 %v1281, 2147483648
        %v1346 = vxor.u32 %v1282, 2147483648
        %v1347 = vxor.u32 %v1283, 2147483648
        %v1348 = vxor.u32 %v1284, 2147483648
        %v1349 = vxor.u32 %v1285, 2147483648
        %v1350 = vxor.u32 %v1286, 2147483648
        %v1351 = vxor.u32 %v1287, 2147483648
        %v1352 = vxor.u32 %v1288, 2147483648
        %v1353 = vxor.u32 %v1289, 2147483648
        %v1354 = vxor.u32 %v1290, 2147483648
        %v1355 = vxor.u32 %v1291, 2147483648
        %v1356 = vxor.u32 %v1292, 2147483648
        %v1357 = vxor.u32 %v1293, 2147483648
        %v1358 = vxor.u32 %v1294, 2147483648
        %v1359 = vxor.u32 %v1295, 2147483648
        %v1360 = vxor.u32 %v1296, 2147483648
        %v1361 = vxor.u32 %v1297, 2147483648
        %v1362 = vxor.u32 %v1298, 2147483648
        %v1363 = vxor.u32 %v1299, 2147483648
        %v1364 = vxor.u32 %v1300, 2147483648
        %v1365 = vxor.u32 %v1301, 2147483648
        %v1366 = vxor.u32 %v1302, 2147483648
        %v1367 = vxor.u32 %v1303, 2147483648
        %v1368 = vxor.u32 %v1304, 2147483648
        %v1369 = vxor.u32 %v1305, 2147483648
        %v1370 = vxor.u32 %v1306, 2147483648
        %v1371 = vxor.u32 %v1307, 2147483648
        %v1372 = vxor.u32 %v1308, 2147483648
        %v1373 = vxor.u32 %v1309, 2147483648
        %v1374 = vxor.u32 %v1310, 2147483648
        %v1375 = vxor.u32 %v1311, 2147483648
        %v1376 = vxor.u32 %v1312, 2147483648
        %v1377 = vxor.u32 %v1313, 2147483648
        %v1378 = vxor.u32 %v1314, 2147483648
        %v1379 = vxor.u32 %v1315, 2147483648
        %v1380 = vxor.u32 %v1316, 2147483648
        %v1381 = vmul.f32 %v1317, 1.442695
        %v1382 = vpow.pop %v1381
        %v1383 = vmul.f32 %v1318, 1.442695
        %v1384 = vpow.pop %v1383
        %v1385 = vmul.f32 %v1319, 1.442695
        %v1386 = vpow.pop %v1385
        %v1387 = vmul.f32 %v1320, 1.442695
        %v1388 = vpow.pop %v1387
        %v1389 = vmul.f32 %v1321, 1.442695
        %v1390 = vpow.pop %v1389
        %v1391 = vmul.f32 %v1322, 1.442695
        %v1392 = vpow.pop %v1391
        %v1393 = vmul.f32 %v1323, 1.442695
        %v1394 = vpow.pop %v1393
        %v1395 = vmul.f32 %v1324, 1.442695
        %v1396 = vpow.pop %v1395
        %v1397 = vmul.f32 %v1325, 1.442695
        %v1398 = vpow.pop %v1397
        %v1399 = vmul.f32 %v1326, 1.442695
        %v1400 = vpow.pop %v1399
        %v1401 = vmul.f32 %v1327, 1.442695
        %v1402 = vpow.pop %v1401
        %v1403 = vmul.f32 %v1328, 1.442695
        %v1404 = vpow.pop %v1403
        %v1405 = vmul.f32 %v1329, 1.442695
        %v1406 = vpow.pop %v1405
        %v1407 = vmul.f32 %v1330, 1.442695
        %v1408 = vpow.pop %v1407
        %v1409 = vmul.f32 %v1331, 1.442695
        %v1410 = vpow.pop %v1409
        %v1411 = vmul.f32 %v1332, 1.442695
        %v1412 = vpow.pop %v1411
        %v1413 = vmul.f32 %v1333, 1.442695
        %v1414 = vpow.pop %v1413
        %v1415 = vmul.f32 %v1334, 1.442695
        %v1416 = vpow.pop %v1415
        %v1417 = vmul.f32 %v1335, 1.442695
        %v1418 = vpow.pop %v1417
        %v1419 = vmul.f32 %v1336, 1.442695
        %v1420 = vpow.pop %v1419
        %v1421 = vmul.f32 %v1337, 1.442695
        %v1422 = vpow.pop %v1421
        %v1423 = vmul.f32 %v1338, 1.442695
        %v1424 = vpow.pop %v1423
        %v1425 = vmul.f32 %v1339, 1.442695
        %v1426 = vpow.pop %v1425
        %v1427 = vmul.f32 %v1340, 1.442695
        %v1428 = vpow.pop %v1427
        %v1429 = vmul.f32 %v1341, 1.442695
        %v1430 = vpow.pop %v1429
        %v1431 = vmul.f32 %v1342, 1.442695
        %v1432 = vpow.pop %v1431
        %v1433 = vmul.f32 %v1343, 1.442695
        %v1434 = vpow.pop %v1433
        %v1435 = vmul.f32 %v1344, 1.442695
        %v1436 = vpow.pop %v1435
        %v1437 = vmul.f32 %v1345, 1.442695
        %v1438 = vpow.pop %v1437
        %v1439 = vmul.f32 %v1346, 1.442695
        %v1440 = vpow.pop %v1439
        %v1441 = vmul.f32 %v1347, 1.442695
        %v1442 = vpow.pop %v1441
        %v1443 = vmul.f32 %v1348, 1.442695
        %v1444 = vpow.pop %v1443
        %v1445 = vmul.f32 %v1349, 1.442695
        %v1446 = vpow.pop %v1445
        %v1447 = vmul.f32 %v1350, 1.442695
        %v1448 = vpow.pop %v1447
        %v1449 = vmul.f32 %v1351, 1.442695
        %v1450 = vpow.pop %v1449
        %v1451 = vmul.f32 %v1352, 1.442695
        %v1452 = vpow.pop %v1451
        %v1453 = vmul.f32 %v1353, 1.442695
        %v1454 = vpow.pop %v1453
        %v1455 = vmul.f32 %v1354, 1.442695
        %v1456 = vpow.pop %v1455
        %v1457 = vmul.f32 %v1355, 1.442695
        %v1458 = vpow.pop %v1457
        %v1459 = vmul.f32 %v1356, 1.442695
        %v1460 = vpow.pop %v1459
        %v1461 = vmul.f32 %v1357, 1.442695
        %v1462 = vpow.pop %v1461
        %v1463 = vmul.f32 %v1358, 1.442695
        %v1464 = vpow.pop %v1463
        %v1465 = vmul.f32 %v1359, 1.442695
        %v1466 = vpow.pop %v1465
        %v1467 = vmul.f32 %v1360, 1.442695
        %v1468 = vpow.pop %v1467
        %v1469 = vmul.f32 %v1361, 1.442695
        %v1470 = vpow.pop %v1469
        %v1471 = vmul.f32 %v1362, 1.442695
        %v1472 = vpow.pop %v1471
        %v1473 = vmul.f32 %v1363, 1.442695
        %v1474 = vpow.pop %v1473
        %v1475 = vmul.f32 %v1364, 1.442695
        %v1476 = vpow.pop %v1475
        %v1477 = vmul.f32 %v1365, 1.442695
        %v1478 = vpow.pop %v1477
        %v1479 = vmul.f32 %v1366, 1.442695
        %v1480 = vpow.pop %v1479
        %v1481 = vmul.f32 %v1367, 1.442695
        %v1482 = vpow.pop %v1481
        %v1483 = vmul.f32 %v1368, 1.442695
        %v1484 = vpow.pop %v1483
        %v1485 = vmul.f32 %v1369, 1.442695
        %v1486 = vpow.pop %v1485
        %v1487 = vmul.f32 %v1370, 1.442695
        %v1488 = vpow.pop %v1487
        %v1489 = vmul.f32 %v1371, 1.442695
        %v1490 = vpow.pop %v1489
        %v1491 = vmul.f32 %v1372, 1.442695
        %v1492 = vpow.pop %v1491
        %v1493 = vmul.f32 %v1373, 1.442695
        %v1494 = vpow.pop %v1493
        %v1495 = vmul.f32 %v1374, 1.442695
        %v1496 = vpow.pop %v1495
        %v1497 = vmul.f32 %v1375, 1.442695
        %v1498 = vpow.pop %v1497
        %v1499 = vmul.f32 %v1376, 1.442695
        %v1500 = vpow.pop %v1499
        %v1501 = vmul.f32 %v1377, 1.442695
        %v1502 = vpow.pop %v1501
        %v1503 = vmul.f32 %v1378, 1.442695
        %v1504 = vpow.pop %v1503
        %v1505 = vmul.f32 %v1379, 1.442695
        %v1506 = vpow.pop %v1505
        %v1507 = vmul.f32 %v1380, 1.442695
        %v1508 = vpow.pop %v1507
        %v1509 = vadd.f32 %v1382, 1.0
        %v1510 = vadd.f32 %v1384, 1.0
        %v1511 = vadd.f32 %v1386, 1.0
        %v1512 = vadd.f32 %v1388, 1.0
        %v1513 = vadd.f32 %v1390, 1.0
        %v1514 = vadd.f32 %v1392, 1.0
        %v1515 = vadd.f32 %v1394, 1.0
        %v1516 = vadd.f32 %v1396, 1.0
        %v1517 = vadd.f32 %v1398, 1.0
        %v1518 = vadd.f32 %v1400, 1.0
        %v1519 = vadd.f32 %v1402, 1.0
        %v1520 = vadd.f32 %v1404, 1.0
        %v1521 = vadd.f32 %v1406, 1.0
        %v1522 = vadd.f32 %v1408, 1.0
        %v1523 = vadd.f32 %v1410, 1.0
        %v1524 = vadd.f32 %v1412, 1.0
        %v1525 = vadd.f32 %v1414, 1.0
        %v1526 = vadd.f32 %v1416, 1.0
        %v1527 = vadd.f32 %v1418, 1.0
        %v1528 = vadd.f32 %v1420, 1.0
        %v1529 = vadd.f32 %v1422, 1.0
        %v1530 = vadd.f32 %v1424, 1.0
        %v1531 = vadd.f32 %v1426, 1.0
        %v1532 = vadd.f32 %v1428, 1.0
        %v1533 = vadd.f32 %v1430, 1.0
        %v1534 = vadd.f32 %v1432, 1.0
        %v1535 = vadd.f32 %v1434, 1.0
        %v1536 = vadd.f32 %v1436, 1.0
        %v1537 = vadd.f32 %v1438, 1.0
        %v1538 = vadd.f32 %v1440, 1.0
        %v1539 = vadd.f32 %v1442, 1.0
        %v1540 = vadd.f32 %v1444, 1.0
        %v1541 = vadd.f32 %v1446, 1.0
        %v1542 = vadd.f32 %v1448, 1.0
        %v1543 = vadd.f32 %v1450, 1.0
        %v1544 = vadd.f32 %v1452, 1.0
        %v1545 = vadd.f32 %v1454, 1.0
        %v1546 = vadd.f32 %v1456, 1.0
        %v1547 = vadd.f32 %v1458, 1.0
        %v1548 = vadd.f32 %v1460, 1.0
        %v1549 = vadd.f32 %v1462, 1.0
        %v1550 = vadd.f32 %v1464, 1.0
        %v1551 = vadd.f32 %v1466, 1.0
        %v1552 = vadd.f32 %v1468, 1.0
        %v1553 = vadd.f32 %v1470, 1.0
        %v1554 = vadd.f32 %v1472, 1.0
        %v1555 = vadd.f32 %v1474, 1.0
        %v1556 = vadd.f32 %v1476, 1.0
        %v1557 = vadd.f32 %v1478, 1.0
        %v1558 = vadd.f32 %v1480, 1.0
        %v1559 = vadd.f32 %v1482, 1.0
        %v1560 = vadd.f32 %v1484, 1.0
        %v1561 = vadd.f32 %v1486, 1.0
        %v1562 = vadd.f32 %v1488, 1.0
        %v1563 = vadd.f32 %v1490, 1.0
        %v1564 = vadd.f32 %v1492, 1.0
        %v1565 = vadd.f32 %v1494, 1.0
        %v1566 = vadd.f32 %v1496, 1.0
        %v1567 = vadd.f32 %v1498, 1.0
        %v1568 = vadd.f32 %v1500, 1.0
        %v1569 = vadd.f32 %v1502, 1.0
        %v1570 = vadd.f32 %v1504, 1.0
        %v1571 = vadd.f32 %v1506, 1.0
        %v1572 = vadd.f32 %v1508, 1.0
        %v1573 = vrcp.pop %v1509
        %v1574 = vmul.f32 1.0, %v1573
        %v1575 = vrcp.pop %v1510
        %v1576 = vmul.f32 1.0, %v1575
        %v1577 = vrcp.pop %v1511
        %v1578 = vmul.f32 1.0, %v1577
        %v1579 = vrcp.pop %v1512
        %v1580 = vmul.f32 1.0, %v1579
        %v1581 = vrcp.pop %v1513
        %v1582 = vmul.f32 1.0, %v1581
        %v1583 = vrcp.pop %v1514
        %v1584 = vmul.f32 1.0, %v1583
        %v1585 = vrcp.pop %v1515
        %v1586 = vmul.f32 1.0, %v1585
        %v1587 = vrcp.pop %v1516
        %v1588 = vmul.f32 1.0, %v1587
        %v1589 = vrcp.pop %v1517
        %v1590 = vmul.f32 1.0, %v1589
        %v1591 = vrcp.pop %v1518
        %v1592 = vmul.f32 1.0, %v1591
        %v1593 = vrcp.pop %v1519
        %v1594 = vmul.f32 1.0, %v1593
        %v1595 = vrcp.pop %v1520
        %v1596 = vmul.f32 1.0, %v1595
        %v1597 = vrcp.pop %v1521
        %v1598 = vmul.f32 1.0, %v1597
        %v1599 = vrcp.pop %v1522
        %v1600 = vmul.f32 1.0, %v1599
        %v1601 = vrcp.pop %v1523
        %v1602 = vmul.f32 1.0, %v1601
        %v1603 = vrcp.pop %v1524
        %v1604 = vmul.f32 1.0, %v1603
        %v1605 = vrcp.pop %v1525
        %v1606 = vmul.f32 1.0, %v1605
        %v1607 = vrcp.pop %v1526
        %v1608 = vmul.f32 1.0, %v1607
        %v1609 = vrcp.pop %v1527
        %v1610 = vmul.f32 1.0, %v1609
        %v1611 = vrcp.pop %v1528
        %v1612 = vmul.f32 1.0, %v1611
        %v1613 = vrcp.pop %v1529
        %v1614 = vmul.f32 1.0, %v1613
        %v1615 = vrcp.pop %v1530
        %v1616 = vmul.f32 1.0, %v1615
        %v1617 = vrcp.pop %v1531
        %v1618 = vmul.f32 1.0, %v1617
        %v1619 = vrcp.pop %v1532
        %v1620 = vmul.f32 1.0, %v1619
        %v1621 = vrcp.pop %v1533
        %v1622 = vmul.f32 1.0, %v1621
        %v1623 = vrcp.pop %v1534
        %v1624 = vmul.f32 1.0, %v1623
        %v1625 = vrcp.pop %v1535
        %v1626 = vmul.f32 1.0, %v1625
        %v1627 = vrcp.pop %v1536
        %v1628 = vmul.f32 1.0, %v1627
        %v1629 = vrcp.pop %v1537
        %v1630 = vmul.f32 1.0, %v1629
        %v1631 = vrcp.pop %v1538
        %v1632 = vmul.f32 1.0, %v1631
        %v1633 = vrcp.pop %v1539
        %v1634 = vmul.f32 1.0, %v1633
        %v1635 = vrcp.pop %v1540
        %v1636 = vmul.f32 1.0, %v1635
        %v1637 = vrcp.pop %v1541
        %v1638 = vmul.f32 1.0, %v1637
        %v1639 = vrcp.pop %v1542
        %v1640 = vmul.f32 1.0, %v1639
        %v1641 = vrcp.pop %v1543
        %v1642 = vmul.f32 1.0, %v1641
        %v1643 = vrcp.pop %v1544
        %v1644 = vmul.f32 1.0, %v1643
        %v1645 = vrcp.pop %v1545
        %v1646 = vmul.f32 1.0, %v1645
        %v1647 = vrcp.pop %v1546
        %v1648 = vmul.f32 1.0, %v1647
        %v1649 = vrcp.pop %v1547
        %v1650 = vmul.f32 1.0, %v1649
        %v1651 = vrcp.pop %v1548
        %v1652 = vmul.f32 1.0, %v1651
        %v1653 = vrcp.pop %v1549
        %v1654 = vmul.f32 1.0, %v1653
        %v1655 = vrcp.pop %v1550
        %v1656 = vmul.f32 1.0, %v1655
        %v1657 = vrcp.pop %v1551
        %v1658 = vmul.f32 1.0, %v1657
        %v1659 = vrcp.pop %v1552
        %v1660 = vmul.f32 1.0, %v1659
        %v1661 = vrcp.pop %v1553
        %v1662 = vmul.f32 1.0, %v1661
        %v1663 = vrcp.pop %v1554
        %v1664 = vmul.f32 1.0, %v1663
        %v1665 = vrcp.pop %v1555
        %v1666 = vmul.f32 1.0, %v1665
        %v1667 = vrcp.pop %v1556
        %v1668 = vmul.f32 1.0, %v1667
        %v1669 = vrcp.pop %v1557
        %v1670 = vmul.f32 1.0, %v1669
        %v1671 = vrcp.pop %v1558
        %v1672 = vmul.f32 1.0, %v1671
        %v1673 = vrcp.pop %v1559
        %v1674 = vmul.f32 1.0, %v1673
        %v1675 = vrcp.pop %v1560
        %v1676 = vmul.f32 1.0, %v1675
        %v1677 = vrcp.pop %v1561
        %v1678 = vmul.f32 1.0, %v1677
        %v1679 = vrcp.pop %v1562
        %v1680 = vmul.f32 1.0, %v1679
        %v1681 = vrcp.pop %v1563
        %v1682 = vmul.f32 1.0, %v1681
        %v1683 = vrcp.pop %v1564
        %v1684 = vmul.f32 1.0, %v1683
        %v1685 = vrcp.pop %v1565
        %v1686 = vmul.f32 1.0, %v1685
        %v1687 = vrcp.pop %v1566
        %v1688 = vmul.f32 1.0, %v1687
        %v1689 = vrcp.pop %v1567
        %v1690 = vmul.f32 1.0, %v1689
        %v1691 = vrcp.pop %v1568
        %v1692 = vmul.f32 1.0, %v1691
        %v1693 = vrcp.pop %v1569
        %v1694 = vmul.f32 1.0, %v1693
        %v1695 = vrcp.pop %v1570
        %v1696 = vmul.f32 1.0, %v1695
        %v1697 = vrcp.pop %v1571
        %v1698 = vmul.f32 1.0, %v1697
        %v1699 = vrcp.pop %v1572
        %v1700 = vmul.f32 1.0, %v1699
        %v1701 = vmul.f32 %v1638, %v448
        %v1702 = vmul.f32 %v1640, %v449
        %v1703 = vmul.f32 %v1642, %v450
        %v1704 = vmul.f32 %v1644, %v451
        %v1705 = vmul.f32 %v1646, %v452
        %v1706 = vmul.f32 %v1648, %v453
        %v1707 = vmul.f32 %v1650, %v454
        %v1708 = vmul.f32 %v1652, %v455
        %v1709 = vmul.f32 %v1654, %v456
        %v1710 = vmul.f32 %v1656, %v457
        %v1711 = vmul.f32 %v1658, %v458
        %v1712 = vmul.f32 %v1660, %v459
        %v1713 = vmul.f32 %v1662, %v460
        %v1714 = vmul.f32 %v1664, %v461
        %v1715 = vmul.f32 %v1666, %v462
        %v1716 = vmul.f32 %v1668, %v463
        %v1717 = vmul.f32 %v1670, %v464
        %v1718 = vmul.f32 %v1672, %v465
        %v1719 = vmul.f32 %v1674, %v466
        %v1720 = vmul.f32 %v1676, %v467
        %v1721 = vmul.f32 %v1678, %v468
        %v1722 = vmul.f32 %v1680, %v469
        %v1723 = vmul.f32 %v1682, %v470
        %v1724 = vmul.f32 %v1684, %v471
        %v1725 = vmul.f32 %v1686, %v472
        %v1726 = vmul.f32 %v1688, %v473
        %v1727 = vmul.f32 %v1690, %v474
        %v1728 = vmul.f32 %v1692, %v475
        %v1729 = vmul.f32 %v1694, %v476
        %v1730 = vmul.f32 %v1696, %v477
        %v1731 = vmul.f32 %v1698, %v478
        %v1732 = vmul.f32 %v1700, %v479
        %v1733 = vpack.c.bf16 %v1705, %v1701
        %v1734 = vpack.c.bf16 %v1706, %v1702
        %v1735 = vpack.c.bf16 %v1707, %v1703
        %v1736 = vpack.c.bf16 %v1708, %v1704
        %v1737 = vpack.c.bf16 %v1713, %v1709
        %v1738 = vpack.c.bf16 %v1714, %v1710
        %v1739 = vpack.c.bf16 %v1715, %v1711
        %v1740 = vpack.c.bf16 %v1716, %v1712
        %v1741 = vpack.c.bf16 %v1721, %v1717
        %v1742 = vpack.c.bf16 %v1722, %v1718
        %v1743 = vpack.c.bf16 %v1723, %v1719
        %v1744 = vpack.c.bf16 %v1724, %v1720
        %v1745 = vpack.c.bf16 %v1729, %v1725
        %v1746 = vpack.c.bf16 %v1730, %v1726
        %v1747 = vpack.c.bf16 %v1731, %v1727
        %v1748 = vpack.c.bf16 %v1732, %v1728
        %v1749 = vld [vmem:[%s4] sm:$0xf]
        %v1750 = vld [vmem:[%s4 + $0x4] sm:$0xf]
        %v1751 = vld [vmem:[%s4 + $0x8] sm:$0xf]
        %v1752 = vld [vmem:[%s4 + $0xc] sm:$0xf]
        %v1753 = vld [vmem:[%s4 + $0x10] sm:$0xf]
        %v1754 = vld [vmem:[%s4 + $0x14] sm:$0xf]
        %v1755 = vld [vmem:[%s4 + $0x18] sm:$0xf]
        %v1756 = vld [vmem:[%s4 + $0x1c] sm:$0xf]
        %v1757 = vld [vmem:[%s5] sm:$0xf]
        %v1758 = vld [vmem:[%s5 + $0x4] sm:$0xf]
        %v1759 = vld [vmem:[%s5 + $0x8] sm:$0xf]
        %v1760 = vld [vmem:[%s5 + $0xc] sm:$0xf]
        %v1761 = vld [vmem:[%s5 + $0x10] sm:$0xf]
        %v1762 = vld [vmem:[%s5 + $0x14] sm:$0xf]
        %v1763 = vld [vmem:[%s5 + $0x18] sm:$0xf]
        %v1764 = vld [vmem:[%s5 + $0x1c] sm:$0xf]
        %v1773 = vunpack.c.l.b16 %v1757
        %v1774 = vunpack.c.l.b16 %v1758
        %v1775 = vunpack.c.l.b16 %v1759
        %v1776 = vunpack.c.l.b16 %v1760
        %v1777 = vunpack.c.l.b16 %v1761
        %v1778 = vunpack.c.l.b16 %v1762
        %v1779 = vunpack.c.l.b16 %v1763
        %v1780 = vunpack.c.l.b16 %v1764
        %v1781 = vpack.c.b16 %v1774, %v1773
        %v1782 = vpack.c.b16 %v1776, %v1775
        %v1783 = vpack.c.b16 %v1778, %v1777
        %v1784 = vpack.c.b16 %v1780, %v1779
        %v1786 = vsel %vm616, %v1781, 0
        %v1789 = vsel %vm616, %v1782, 0
        %v1792 = vsel %vm616, %v1783, 0
        %v1795 = vsel %vm616, %v1784, 0
        %1797 = vmatprep.subr.bf16.mxu0 %v529
        %1798 = vmatpush1.bf16.msra.mxu0 %v528
        %1799 = vmatprep.subr.bf16.mxu0 %v533
        %1800 = vmatpush1.bf16.msra.mxu0 %v532
        %1801 = vmatprep.subr.bf16.mxu0 %v537
        %1802 = vmatpush1.bf16.msra.mxu0 %v536
        %1803 = vmatprep.subr.bf16.mxu0 %v541
        %1804 = vmatpush1.bf16.msra.mxu0 %v540
        %1805 = vmatprep.subr.bf16.mxu0 0
        %1806 = vmatpush1.bf16.msra.mxu0 0
        %1807 = vmatprep.subr.bf16.mxu0 0
        %1808 = vmatpush1.bf16.msra.mxu0 0
        %1809 = vmatprep.subr.bf16.mxu0 0
        %1810 = vmatpush1.bf16.msra.mxu0 0
        %1811 = vmatprep.subr.bf16.mxu0 0
        %1812 = vmatpush1.bf16.msra.mxu0 0
        %1813 = vmatprep.subr.bf16.mxu0 0
        %1814 = vmatpush1.bf16.msra.mxu0 0
        %1815 = vmatprep.subr.bf16.mxu0 0
        %1816 = vmatpush1.bf16.msra.mxu0 0
        %1817 = vmatprep.subr.bf16.mxu0 0
        %1818 = vmatpush1.bf16.msra.mxu0 0
        %1819 = vmatprep.subr.bf16.mxu0 0
        %1820 = vmatpush1.bf16.msra.mxu0 0
        %1821 = vmatprep.subr.bf16.mxu0 0
        %1822 = vmatpush1.bf16.msra.mxu0 0
        %1823 = vmatprep.subr.bf16.mxu0 0
        %1824 = vmatpush1.bf16.msra.mxu0 0
        %1825 = vmatprep.subr.bf16.mxu0 0
        %1826 = vmatpush1.bf16.msra.mxu0 0
        %1827 = vmatprep.subr.bf16.mxu0 0
        %1828 = vmatpush1.bf16.msra.mxu0 0
        %1829 = vmatprep.mubr.bf16.mxu0 0
        %1830 = vmatmul.mubr.bf16.gmra.mrb[0].mxu0 %v1786
        %v1831 = vpop.f32.mrb[0].mxu0
        %v1832 = vadd.f32 0.0, %v1831
        %v1833 = vpop.f32.mrb[0].mxu0
        %v1834 = vadd.f32 0.0, %v1833
        %v1835 = vpop.f32.mrb[0].mxu0
        %v1836 = vadd.f32 0.0, %v1835
        %v1837 = vpop.f32.mrb[0].mxu0
        %v1838 = vadd.f32 0.0, %v1837
        %1839 = vmatprep.mubr.bf16.mxu0 0
        %1840 = vmatmul.mubr.bf16.gmra.mrb[0].mxu0 %v1789
        %v1841 = vpop.f32.mrb[0].mxu0
        %v1842 = vadd.f32 0.0, %v1841
        %v1843 = vpop.f32.mrb[0].mxu0
        %v1844 = vadd.f32 0.0, %v1843
        %v1845 = vpop.f32.mrb[0].mxu0
        %v1846 = vadd.f32 0.0, %v1845
        %v1847 = vpop.f32.mrb[0].mxu0
        %v1848 = vadd.f32 0.0, %v1847
        %1849 = vmatprep.mubr.bf16.mxu0 0
        %1850 = vmatmul.mubr.bf16.gmra.mrb[0].mxu0 %v1792
        %v1851 = vpop.f32.mrb[0].mxu0
        %v1852 = vadd.f32 0.0, %v1851
        %v1853 = vpop.f32.mrb[0].mxu0
        %v1854 = vadd.f32 0.0, %v1853
        %v1855 = vpop.f32.mrb[0].mxu0
        %v1856 = vadd.f32 0.0, %v1855
        %v1857 = vpop.f32.mrb[0].mxu0
        %v1858 = vadd.f32 0.0, %v1857
        %1859 = vmatprep.mubr.bf16.mxu0 0
        %1860 = vmatmul.mubr.bf16.gmra.mrb[0].mxu0 %v1795
        %v1861 = vpop.f32.mrb[0].mxu0
        %v1862 = vadd.f32 0.0, %v1861
        %v1863 = vpop.f32.mrb[0].mxu0
        %v1864 = vadd.f32 0.0, %v1863
        %v1865 = vpop.f32.mrb[0].mxu0
        %v1866 = vadd.f32 0.0, %v1865
        %v1867 = vpop.f32.mrb[0].mxu0
        %v1868 = vadd.f32 0.0, %v1867
        %1869 = vdwg.mxu0
        %1870 = vmatprep.subr.bf16.mxu0 %v531
        %1871 = vmatpush1.bf16.msra.mxu0 %v530
        %1872 = vmatprep.subr.bf16.mxu0 %v535
        %1873 = vmatpush1.bf16.msra.mxu0 %v534
        %1874 = vmatprep.subr.bf16.mxu0 %v539
        %1875 = vmatpush1.bf16.msra.mxu0 %v538
        %1876 = vmatprep.subr.bf16.mxu0 %v543
        %1877 = vmatpush1.bf16.msra.mxu0 %v542
        %1878 = vmatprep.subr.bf16.mxu0 0
        %1879 = vmatpush1.bf16.msra.mxu0 0
        %1880 = vmatprep.subr.bf16.mxu0 0
        %1881 = vmatpush1.bf16.msra.mxu0 0
        %1882 = vmatprep.subr.bf16.mxu0 0
        %1883 = vmatpush1.bf16.msra.mxu0 0
        %1884 = vmatprep.subr.bf16.mxu0 0
        %1885 = vmatpush1.bf16.msra.mxu0 0
        %1886 = vmatprep.subr.bf16.mxu0 0
        %1887 = vmatpush1.bf16.msra.mxu0 0
        %1888 = vmatprep.subr.bf16.mxu0 0
        %1889 = vmatpush1.bf16.msra.mxu0 0
        %1890 = vmatprep.subr.bf16.mxu0 0
        %1891 = vmatpush1.bf16.msra.mxu0 0
        %1892 = vmatprep.subr.bf16.mxu0 0
        %1893 = vmatpush1.bf16.msra.mxu0 0
        %1894 = vmatprep.subr.bf16.mxu0 0
        %1895 = vmatpush1.bf16.msra.mxu0 0
        %1896 = vmatprep.subr.bf16.mxu0 0
        %1897 = vmatpush1.bf16.msra.mxu0 0
        %1898 = vmatprep.subr.bf16.mxu0 0
        %1899 = vmatpush1.bf16.msra.mxu0 0
        %1900 = vmatprep.subr.bf16.mxu0 0
        %1901 = vmatpush1.bf16.msra.mxu0 0
        %1902 = vmatprep.mubr.bf16.mxu0 0
        %1903 = vmatmul.mubr.bf16.gmra.mrb[0].mxu0 %v1786
        %v1904 = vpop.f32.mrb[0].mxu0
        %v1905 = vadd.f32 0.0, %v1904
        %v1906 = vpop.f32.mrb[0].mxu0
        %v1907 = vadd.f32 0.0, %v1906
        %v1908 = vpop.f32.mrb[0].mxu0
        %v1909 = vadd.f32 0.0, %v1908
        %v1910 = vpop.f32.mrb[0].mxu0
        %v1911 = vadd.f32 0.0, %v1910
        %1912 = vmatprep.mubr.bf16.mxu0 0
        %1913 = vmatmul.mubr.bf16.gmra.mrb[0].mxu0 %v1789
        %v1914 = vpop.f32.mrb[0].mxu0
        %v1915 = vadd.f32 0.0, %v1914
        %v1916 = vpop.f32.mrb[0].mxu0
        %v1917 = vadd.f32 0.0, %v1916
        %v1918 = vpop.f32.mrb[0].mxu0
        %v1919 = vadd.f32 0.0, %v1918
        %v1920 = vpop.f32.mrb[0].mxu0
        %v1921 = vadd.f32 0.0, %v1920
        %1922 = vmatprep.mubr.bf16.mxu0 0
        %1923 = vmatmul.mubr.bf16.gmra.mrb[0].mxu0 %v1792
        %v1924 = vpop.f32.mrb[0].mxu0
        %v1925 = vadd.f32 0.0, %v1924
        %v1926 = vpop.f32.mrb[0].mxu0
        %v1927 = vadd.f32 0.0, %v1926
        %v1928 = vpop.f32.mrb[0].mxu0
        %v1929 = vadd.f32 0.0, %v1928
        %v1930 = vpop.f32.mrb[0].mxu0
        %v1931 = vadd.f32 0.0, %v1930
        %1932 = vmatprep.mubr.bf16.mxu0 0
        %1933 = vmatmul.mubr.bf16.gmra.mrb[0].mxu0 %v1795
        %v1934 = vpop.f32.mrb[0].mxu0
        %v1935 = vadd.f32 0.0, %v1934
        %v1936 = vpop.f32.mrb[0].mxu0
        %v1937 = vadd.f32 0.0, %v1936
        %v1938 = vpop.f32.mrb[0].mxu0
        %v1939 = vadd.f32 0.0, %v1938
        %v1940 = vpop.f32.mrb[0].mxu0
        %v1941 = vadd.f32 0.0, %v1940
        %1942 = vdwg.mxu0
        %v1951 = vunpack.c.l.b16 %v1749
        %v1952 = vunpack.c.l.b16 %v1750
        %v1953 = vunpack.c.l.b16 %v1751
        %v1954 = vunpack.c.l.b16 %v1752
        %v1955 = vunpack.c.l.b16 %v1753
        %v1956 = vunpack.c.l.b16 %v1754
        %v1957 = vunpack.c.l.b16 %v1755
        %v1958 = vunpack.c.l.b16 %v1756
        %v1959 = vpack.c.b16 %v1952, %v1951
        %v1960 = vpack.c.b16 %v1954, %v1953
        %v1961 = vpack.c.b16 %v1956, %v1955
        %v1962 = vpack.c.b16 %v1958, %v1957
        %v1964 = vsel %vm616, %v1959, 0
        %v1967 = vsel %vm616, %v1960, 0
        %v1970 = vsel %vm616, %v1961, 0
        %v1973 = vsel %vm616, %v1962, 0
        %1975 = vmatprep.subr.bf16.mxu0 %v1734
        %1976 = vmatpush1.bf16.msra.mxu0 %v1733
        %1977 = vmatprep.subr.bf16.mxu0 %v1738
        %1978 = vmatpush1.bf16.msra.mxu0 %v1737
        %1979 = vmatprep.subr.bf16.mxu0 %v1742
        %1980 = vmatpush1.bf16.msra.mxu0 %v1741
        %1981 = vmatprep.subr.bf16.mxu0 %v1746
        %1982 = vmatpush1.bf16.msra.mxu0 %v1745
        %1983 = vmatprep.subr.bf16.mxu0 0
        %1984 = vmatpush1.bf16.msra.mxu0 0
        %1985 = vmatprep.subr.bf16.mxu0 0
        %1986 = vmatpush1.bf16.msra.mxu0 0
        %1987 = vmatprep.subr.bf16.mxu0 0
        %1988 = vmatpush1.bf16.msra.mxu0 0
        %1989 = vmatprep.subr.bf16.mxu0 0
        %1990 = vmatpush1.bf16.msra.mxu0 0
        %1991 = vmatprep.subr.bf16.mxu0 0
        %1992 = vmatpush1.bf16.msra.mxu0 0
        %1993 = vmatprep.subr.bf16.mxu0 0
        %1994 = vmatpush1.bf16.msra.mxu0 0
        %1995 = vmatprep.subr.bf16.mxu0 0
        %1996 = vmatpush1.bf16.msra.mxu0 0
        %1997 = vmatprep.subr.bf16.mxu0 0
        %1998 = vmatpush1.bf16.msra.mxu0 0
        %1999 = vmatprep.subr.bf16.mxu0 0
        %2000 = vmatpush1.bf16.msra.mxu0 0
        %2001 = vmatprep.subr.bf16.mxu0 0
        %2002 = vmatpush1.bf16.msra.mxu0 0
        %2003 = vmatprep.subr.bf16.mxu0 0
        %2004 = vmatpush1.bf16.msra.mxu0 0
        %2005 = vmatprep.subr.bf16.mxu0 0
        %2006 = vmatpush1.bf16.msra.mxu0 0
        %2007 = vmatprep.mubr.bf16.mxu0 0
        %2008 = vmatmul.mubr.bf16.gmra.mrb[0].mxu0 %v1964
        %v2009 = vpop.f32.mrb[0].mxu0
        %v2010 = vadd.f32 %v1832, %v2009
        %v2011 = vpop.f32.mrb[0].mxu0
        %v2012 = vadd.f32 %v1834, %v2011
        %v2013 = vpop.f32.mrb[0].mxu0
        %v2014 = vadd.f32 %v1836, %v2013
        %v2015 = vpop.f32.mrb[0].mxu0
        %v2016 = vadd.f32 %v1838, %v2015
        %2017 = vmatprep.mubr.bf16.mxu0 0
        %2018 = vmatmul.mubr.bf16.gmra.mrb[0].mxu0 %v1967
        %v2019 = vpop.f32.mrb[0].mxu0
        %v2020 = vadd.f32 %v1842, %v2019
        %v2021 = vpop.f32.mrb[0].mxu0
        %v2022 = vadd.f32 %v1844, %v2021
        %v2023 = vpop.f32.mrb[0].mxu0
        %v2024 = vadd.f32 %v1846, %v2023
        %v2025 = vpop.f32.mrb[0].mxu0
        %v2026 = vadd.f32 %v1848, %v2025
        %2027 = vmatprep.mubr.bf16.mxu0 0
        %2028 = vmatmul.mubr.bf16.gmra.mrb[0].mxu0 %v1970
        %v2029 = vpop.f32.mrb[0].mxu0
        %v2030 = vadd.f32 %v1852, %v2029
        %v2031 = vpop.f32.mrb[0].mxu0
        %v2032 = vadd.f32 %v1854, %v2031
        %v2033 = vpop.f32.mrb[0].mxu0
        %v2034 = vadd.f32 %v1856, %v2033
        %v2035 = vpop.f32.mrb[0].mxu0
        %v2036 = vadd.f32 %v1858, %v2035
        %2037 = vmatprep.mubr.bf16.mxu0 0
        %2038 = vmatmul.mubr.bf16.gmra.mrb[0].mxu0 %v1973
        %v2039 = vpop.f32.mrb[0].mxu0
        %v2040 = vadd.f32 %v1862, %v2039
        %v2041 = vpop.f32.mrb[0].mxu0
        %v2042 = vadd.f32 %v1864, %v2041
        %v2043 = vpop.f32.mrb[0].mxu0
        %v2044 = vadd.f32 %v1866, %v2043
        %v2045 = vpop.f32.mrb[0].mxu0
        %v2046 = vadd.f32 %v1868, %v2045
        %2047 = vdwg.mxu0
        %2048 = vmatprep.subr.bf16.mxu0 %v1736
        %2049 = vmatpush1.bf16.msra.mxu0 %v1735
        %2050 = vmatprep.subr.bf16.mxu0 %v1740
        %2051 = vmatpush1.bf16.msra.mxu0 %v1739
        %2052 = vmatprep.subr.bf16.mxu0 %v1744
        %2053 = vmatpush1.bf16.msra.mxu0 %v1743
        %2054 = vmatprep.subr.bf16.mxu0 %v1748
        %2055 = vmatpush1.bf16.msra.mxu0 %v1747
        %2056 = vmatprep.subr.bf16.mxu0 0
        %2057 = vmatpush1.bf16.msra.mxu0 0
        %2058 = vmatprep.subr.bf16.mxu0 0
        %2059 = vmatpush1.bf16.msra.mxu0 0
        %2060 = vmatprep.subr.bf16.mxu0 0
        %2061 = vmatpush1.bf16.msra.mxu0 0
        %2062 = vmatprep.subr.bf16.mxu0 0
        %2063 = vmatpush1.bf16.msra.mxu0 0
        %2064 = vmatprep.subr.bf16.mxu0 0
        %2065 = vmatpush1.bf16.msra.mxu0 0
        %2066 = vmatprep.subr.bf16.mxu0 0
        %2067 = vmatpush1.bf16.msra.mxu0 0
        %2068 = vmatprep.subr.bf16.mxu0 0
        %2069 = vmatpush1.bf16.msra.mxu0 0
        %2070 = vmatprep.subr.bf16.mxu0 0
        %2071 = vmatpush1.bf16.msra.mxu0 0
        %2072 = vmatprep.subr.bf16.mxu0 0
        %2073 = vmatpush1.bf16.msra.mxu0 0
        %2074 = vmatprep.subr.bf16.mxu0 0
        %2075 = vmatpush1.bf16.msra.mxu0 0
        %2076 = vmatprep.subr.bf16.mxu0 0
        %2077 = vmatpush1.bf16.msra.mxu0 0
        %2078 = vmatprep.subr.bf16.mxu0 0
        %2079 = vmatpush1.bf16.msra.mxu0 0
        %2080 = vmatprep.mubr.bf16.mxu0 0
        %2081 = vmatmul.mubr.bf16.gmra.mrb[0].mxu0 %v1964
        %v2082 = vpop.f32.mrb[0].mxu0
        %v2083 = vadd.f32 %v1905, %v2082
        %v2084 = vpop.f32.mrb[0].mxu0
        %v2085 = vadd.f32 %v1907, %v2084
        %v2086 = vpop.f32.mrb[0].mxu0
        %v2087 = vadd.f32 %v1909, %v2086
        %v2088 = vpop.f32.mrb[0].mxu0
        %v2089 = vadd.f32 %v1911, %v2088
        %2090 = vmatprep.mubr.bf16.mxu0 0
        %2091 = vmatmul.mubr.bf16.gmra.mrb[0].mxu0 %v1967
        %v2092 = vpop.f32.mrb[0].mxu0
        %v2093 = vadd.f32 %v1915, %v2092
        %v2094 = vpop.f32.mrb[0].mxu0
        %v2095 = vadd.f32 %v1917, %v2094
        %v2096 = vpop.f32.mrb[0].mxu0
        %v2097 = vadd.f32 %v1919, %v2096
        %v2098 = vpop.f32.mrb[0].mxu0
        %v2099 = vadd.f32 %v1921, %v2098
        %2100 = vmatprep.mubr.bf16.mxu0 0
        %2101 = vmatmul.mubr.bf16.gmra.mrb[0].mxu0 %v1970
        %v2102 = vpop.f32.mrb[0].mxu0
        %v2103 = vadd.f32 %v1925, %v2102
        %v2104 = vpop.f32.mrb[0].mxu0
        %v2105 = vadd.f32 %v1927, %v2104
        %v2106 = vpop.f32.mrb[0].mxu0
        %v2107 = vadd.f32 %v1929, %v2106
        %v2108 = vpop.f32.mrb[0].mxu0
        %v2109 = vadd.f32 %v1931, %v2108
        %2110 = vmatprep.mubr.bf16.mxu0 0
        %2111 = vmatmul.mubr.bf16.gmra.mrb[0].mxu0 %v1973
        %v2112 = vpop.f32.mrb[0].mxu0
        %v2113 = vadd.f32 %v1935, %v2112
        %v2114 = vpop.f32.mrb[0].mxu0
        %v2115 = vadd.f32 %v1937, %v2114
        %v2116 = vpop.f32.mrb[0].mxu0
        %v2117 = vadd.f32 %v1939, %v2116
        %v2118 = vpop.f32.mrb[0].mxu0
        %v2119 = vadd.f32 %v1941, %v2118
        %2120 = vdwg.mxu0
        %v2121 = vld [vmem:[%s7] sm:$0xff]
        %v2122 = vld [vmem:[%s7 + $0x8] sm:$0xff]
        %v2123 = vld [vmem:[%s7 + $0x10] sm:$0xff]
        %v2124 = vld [vmem:[%s7 + $0x18] sm:$0xff]
        %v2125 = vld [vmem:[%s7 + $0x20] sm:$0xff]
        %v2126 = vld [vmem:[%s7 + $0x28] sm:$0xff]
        %v2127 = vld [vmem:[%s7 + $0x30] sm:$0xff]
        %v2128 = vld [vmem:[%s7 + $0x38] sm:$0xff]
        %2130 = vset.pattern.permute.xlu0 0
        %2131 = vperm.xlu0 %2130, %v2121
        %v2132 = vpop.permute.xlu0 %2131
        %2135 = vset.pattern.permute.xlu0 0
        %2136 = vperm.xlu0 %2135, %v2122
        %v2137 = vpop.permute.xlu0 %2136
        %2140 = vset.pattern.permute.xlu0 0
        %2141 = vperm.xlu0 %2140, %v2123
        %v2142 = vpop.permute.xlu0 %2141
        %2145 = vset.pattern.permute.xlu0 0
        %2146 = vperm.xlu0 %2145, %v2124
        %v2147 = vpop.permute.xlu0 %2146
        %2150 = vset.pattern.permute.xlu0 0
        %2151 = vperm.xlu0 %2150, %v2125
        %v2152 = vpop.permute.xlu0 %2151
        %2155 = vset.pattern.permute.xlu0 0
        %2156 = vperm.xlu0 %2155, %v2126
        %v2157 = vpop.permute.xlu0 %2156
        %2160 = vset.pattern.permute.xlu0 0
        %2161 = vperm.xlu0 %2160, %v2127
        %v2162 = vpop.permute.xlu0 %2161
        %2165 = vset.pattern.permute.xlu0 0
        %2166 = vperm.xlu0 %2165, %v2128
        %v2167 = vpop.permute.xlu0 %2166
        %v2169 = vadd.f32 %v2010, %v2132
        %v2170 = vadd.f32 %v2012, %v2132
        %v2171 = vadd.f32 %v2083, %v2132
        %v2172 = vadd.f32 %v2085, %v2132
        %v2173 = vadd.f32 %v2014, %v2137
        %v2174 = vadd.f32 %v2016, %v2137
        %v2175 = vadd.f32 %v2087, %v2137
        %v2176 = vadd.f32 %v2089, %v2137
        %v2177 = vadd.f32 %v2020, %v2142
        %v2178 = vadd.f32 %v2022, %v2142
        %v2179 = vadd.f32 %v2093, %v2142
        %v2180 = vadd.f32 %v2095, %v2142
        %v2181 = vadd.f32 %v2024, %v2147
        %v2182 = vadd.f32 %v2026, %v2147
        %v2183 = vadd.f32 %v2097, %v2147
        %v2184 = vadd.f32 %v2099, %v2147
        %v2185 = vadd.f32 %v2030, %v2152
        %v2186 = vadd.f32 %v2032, %v2152
        %v2187 = vadd.f32 %v2103, %v2152
        %v2188 = vadd.f32 %v2105, %v2152
        %v2189 = vadd.f32 %v2034, %v2157
        %v2190 = vadd.f32 %v2036, %v2157
        %v2191 = vadd.f32 %v2107, %v2157
        %v2192 = vadd.f32 %v2109, %v2157
        %v2193 = vadd.f32 %v2040, %v2162
        %v2194 = vadd.f32 %v2042, %v2162
        %v2195 = vadd.f32 %v2113, %v2162
        %v2196 = vadd.f32 %v2115, %v2162
        %v2197 = vadd.f32 %v2044, %v2167
        %v2198 = vadd.f32 %v2046, %v2167
        %v2199 = vadd.f32 %v2117, %v2167
        %v2200 = vadd.f32 %v2119, %v2167
        %v2201 = vmax.f32 %v2169, 0.0
        %v2202 = vmax.f32 %v2170, 0.0
        %v2203 = vmax.f32 %v2171, 0.0
        %v2204 = vmax.f32 %v2172, 0.0
        %v2205 = vmax.f32 %v2173, 0.0
        %v2206 = vmax.f32 %v2174, 0.0
        %v2207 = vmax.f32 %v2175, 0.0
        %v2208 = vmax.f32 %v2176, 0.0
        %v2209 = vmax.f32 %v2177, 0.0
        %v2210 = vmax.f32 %v2178, 0.0
        %v2211 = vmax.f32 %v2179, 0.0
        %v2212 = vmax.f32 %v2180, 0.0
        %v2213 = vmax.f32 %v2181, 0.0
        %v2214 = vmax.f32 %v2182, 0.0
        %v2215 = vmax.f32 %v2183, 0.0
        %v2216 = vmax.f32 %v2184, 0.0
        %v2217 = vmax.f32 %v2185, 0.0
        %v2218 = vmax.f32 %v2186, 0.0
        %v2219 = vmax.f32 %v2187, 0.0
        %v2220 = vmax.f32 %v2188, 0.0
        %v2221 = vmax.f32 %v2189, 0.0
        %v2222 = vmax.f32 %v2190, 0.0
        %v2223 = vmax.f32 %v2191, 0.0
        %v2224 = vmax.f32 %v2192, 0.0
        %v2225 = vmax.f32 %v2193, 0.0
        %v2226 = vmax.f32 %v2194, 0.0
        %v2227 = vmax.f32 %v2195, 0.0
        %v2228 = vmax.f32 %v2196, 0.0
        %v2229 = vmax.f32 %v2197, 0.0
        %v2230 = vmax.f32 %v2198, 0.0
        %v2231 = vmax.f32 %v2199, 0.0
        %v2232 = vmax.f32 %v2200, 0.0
        %v2233 = vsub.f32 1.0, %v1574
        %v2234 = vsub.f32 1.0, %v1576
        %v2235 = vsub.f32 1.0, %v1578
        %v2236 = vsub.f32 1.0, %v1580
        %v2237 = vsub.f32 1.0, %v1582
        %v2238 = vsub.f32 1.0, %v1584
        %v2239 = vsub.f32 1.0, %v1586
        %v2240 = vsub.f32 1.0, %v1588
        %v2241 = vsub.f32 1.0, %v1590
        %v2242 = vsub.f32 1.0, %v1592
        %v2243 = vsub.f32 1.0, %v1594
        %v2244 = vsub.f32 1.0, %v1596
        %v2245 = vsub.f32 1.0, %v1598
        %v2246 = vsub.f32 1.0, %v1600
        %v2247 = vsub.f32 1.0, %v1602
        %v2248 = vsub.f32 1.0, %v1604
        %v2249 = vsub.f32 1.0, %v1606
        %v2250 = vsub.f32 1.0, %v1608
        %v2251 = vsub.f32 1.0, %v1610
        %v2252 = vsub.f32 1.0, %v1612
        %v2253 = vsub.f32 1.0, %v1614
        %v2254 = vsub.f32 1.0, %v1616
        %v2255 = vsub.f32 1.0, %v1618
        %v2256 = vsub.f32 1.0, %v1620
        %v2257 = vsub.f32 1.0, %v1622
        %v2258 = vsub.f32 1.0, %v1624
        %v2259 = vsub.f32 1.0, %v1626
        %v2260 = vsub.f32 1.0, %v1628
        %v2261 = vsub.f32 1.0, %v1630
        %v2262 = vsub.f32 1.0, %v1632
        %v2263 = vsub.f32 1.0, %v1634
        %v2264 = vsub.f32 1.0, %v1636
        %v2265 = vmul.f32 %v2233, %v448
        %v2266 = vmul.f32 %v2234, %v449
        %v2267 = vmul.f32 %v2235, %v450
        %v2268 = vmul.f32 %v2236, %v451
        %v2269 = vmul.f32 %v2237, %v452
        %v2270 = vmul.f32 %v2238, %v453
        %v2271 = vmul.f32 %v2239, %v454
        %v2272 = vmul.f32 %v2240, %v455
        %v2273 = vmul.f32 %v2241, %v456
        %v2274 = vmul.f32 %v2242, %v457
        %v2275 = vmul.f32 %v2243, %v458
        %v2276 = vmul.f32 %v2244, %v459
        %v2277 = vmul.f32 %v2245, %v460
        %v2278 = vmul.f32 %v2246, %v461
        %v2279 = vmul.f32 %v2247, %v462
        %v2280 = vmul.f32 %v2248, %v463
        %v2281 = vmul.f32 %v2249, %v464
        %v2282 = vmul.f32 %v2250, %v465
        %v2283 = vmul.f32 %v2251, %v466
        %v2284 = vmul.f32 %v2252, %v467
        %v2285 = vmul.f32 %v2253, %v468
        %v2286 = vmul.f32 %v2254, %v469
        %v2287 = vmul.f32 %v2255, %v470
        %v2288 = vmul.f32 %v2256, %v471
        %v2289 = vmul.f32 %v2257, %v472
        %v2290 = vmul.f32 %v2258, %v473
        %v2291 = vmul.f32 %v2259, %v474
        %v2292 = vmul.f32 %v2260, %v475
        %v2293 = vmul.f32 %v2261, %v476
        %v2294 = vmul.f32 %v2262, %v477
        %v2295 = vmul.f32 %v2263, %v478
        %v2296 = vmul.f32 %v2264, %v479
        %v2297 = vmul.f32 %v1574, %v2201
        %v2298 = vmul.f32 %v1576, %v2202
        %v2299 = vmul.f32 %v1578, %v2203
        %v2300 = vmul.f32 %v1580, %v2204
        %v2301 = vmul.f32 %v1582, %v2205
        %v2302 = vmul.f32 %v1584, %v2206
        %v2303 = vmul.f32 %v1586, %v2207
        %v2304 = vmul.f32 %v1588, %v2208
        %v2305 = vmul.f32 %v1590, %v2209
        %v2306 = vmul.f32 %v1592, %v2210
        %v2307 = vmul.f32 %v1594, %v2211
        %v2308 = vmul.f32 %v1596, %v2212
        %v2309 = vmul.f32 %v1598, %v2213
        %v2310 = vmul.f32 %v1600, %v2214
        %v2311 = vmul.f32 %v1602, %v2215
        %v2312 = vmul.f32 %v1604, %v2216
        %v2313 = vmul.f32 %v1606, %v2217
        %v2314 = vmul.f32 %v1608, %v2218
        %v2315 = vmul.f32 %v1610, %v2219
        %v2316 = vmul.f32 %v1612, %v2220
        %v2317 = vmul.f32 %v1614, %v2221
        %v2318 = vmul.f32 %v1616, %v2222
        %v2319 = vmul.f32 %v1618, %v2223
        %v2320 = vmul.f32 %v1620, %v2224
        %v2321 = vmul.f32 %v1622, %v2225
        %v2322 = vmul.f32 %v1624, %v2226
        %v2323 = vmul.f32 %v1626, %v2227
        %v2324 = vmul.f32 %v1628, %v2228
        %v2325 = vmul.f32 %v1630, %v2229
        %v2326 = vmul.f32 %v1632, %v2230
        %v2327 = vmul.f32 %v1634, %v2231
        %v2328 = vmul.f32 %v1636, %v2232
        %v2329 = vadd.f32 %v2265, %v2297
        %v2330 = vadd.f32 %v2266, %v2298
        %v2331 = vadd.f32 %v2267, %v2299
        %v2332 = vadd.f32 %v2268, %v2300
        %v2333 = vadd.f32 %v2269, %v2301
        %v2334 = vadd.f32 %v2270, %v2302
        %v2335 = vadd.f32 %v2271, %v2303
        %v2336 = vadd.f32 %v2272, %v2304
        %v2337 = vadd.f32 %v2273, %v2305
        %v2338 = vadd.f32 %v2274, %v2306
        %v2339 = vadd.f32 %v2275, %v2307
        %v2340 = vadd.f32 %v2276, %v2308
        %v2341 = vadd.f32 %v2277, %v2309
        %v2342 = vadd.f32 %v2278, %v2310
        %v2343 = vadd.f32 %v2279, %v2311
        %v2344 = vadd.f32 %v2280, %v2312
        %v2345 = vadd.f32 %v2281, %v2313
        %v2346 = vadd.f32 %v2282, %v2314
        %v2347 = vadd.f32 %v2283, %v2315
        %v2348 = vadd.f32 %v2284, %v2316
        %v2349 = vadd.f32 %v2285, %v2317
        %v2350 = vadd.f32 %v2286, %v2318
        %v2351 = vadd.f32 %v2287, %v2319
        %v2352 = vadd.f32 %v2288, %v2320
        %v2353 = vadd.f32 %v2289, %v2321
        %v2354 = vadd.f32 %v2290, %v2322
        %v2355 = vadd.f32 %v2291, %v2323
        %v2356 = vadd.f32 %v2292, %v2324
        %v2357 = vadd.f32 %v2293, %v2325
        %v2358 = vadd.f32 %v2294, %v2326
        %v2359 = vadd.f32 %v2295, %v2327
        %v2360 = vadd.f32 %v2296, %v2328
        %2361 = vst [vmem:[%s443] sm:$0xff] %v2329
        %2362 = vst [vmem:[%s443 + $0x8] sm:$0xff] %v2330
        %2363 = vst [vmem:[%s443 + $0x10] sm:$0xff] %v2331
        %2364 = vst [vmem:[%s443 + $0x18] sm:$0xff] %v2332
        %2365 = vst [vmem:[%s443 + $0x20] sm:$0xff] %v2333
        %2366 = vst [vmem:[%s443 + $0x28] sm:$0xff] %v2334
        %2367 = vst [vmem:[%s443 + $0x30] sm:$0xff] %v2335
        %2368 = vst [vmem:[%s443 + $0x38] sm:$0xff] %v2336
        %2369 = vst [vmem:[%s443 + $0x40] sm:$0xff] %v2337
        %2370 = vst [vmem:[%s443 + $0x48] sm:$0xff] %v2338
        %2371 = vst [vmem:[%s443 + $0x50] sm:$0xff] %v2339
        %2372 = vst [vmem:[%s443 + $0x58] sm:$0xff] %v2340
        %2373 = vst [vmem:[%s443 + $0x60] sm:$0xff] %v2341
        %2374 = vst [vmem:[%s443 + $0x68] sm:$0xff] %v2342
        %2375 = vst [vmem:[%s443 + $0x70] sm:$0xff] %v2343
        %2376 = vst [vmem:[%s443 + $0x78] sm:$0xff] %v2344
        %2377 = vst [vmem:[%s443 + $0x80] sm:$0xff] %v2345
        %2378 = vst [vmem:[%s443 + $0x88] sm:$0xff] %v2346
        %2379 = vst [vmem:[%s443 + $0x90] sm:$0xff] %v2347
        %2380 = vst [vmem:[%s443 + $0x98] sm:$0xff] %v2348
        %2381 = vst [vmem:[%s443 + $0xa0] sm:$0xff] %v2349
        %2382 = vst [vmem:[%s443 + $0xa8] sm:$0xff] %v2350
        %2383 = vst [vmem:[%s443 + $0xb0] sm:$0xff] %v2351
        %2384 = vst [vmem:[%s443 + $0xb8] sm:$0xff] %v2352
        %2385 = vst [vmem:[%s443 + $0xc0] sm:$0xff] %v2353
        %2386 = vst [vmem:[%s443 + $0xc8] sm:$0xff] %v2354
        %2387 = vst [vmem:[%s443 + $0xd0] sm:$0xff] %v2355
        %2388 = vst [vmem:[%s443 + $0xd8] sm:$0xff] %v2356
        %2389 = vst [vmem:[%s443 + $0xe0] sm:$0xff] %v2357
        %2390 = vst [vmem:[%s443 + $0xe8] sm:$0xff] %v2358
        %2391 = vst [vmem:[%s443 + $0xf0] sm:$0xff] %v2359
        %2392 = vst [vmem:[%s443 + $0xf8] sm:$0xff] %v2360
        %s2393 = sand.u32 %s226, 1
        %s2394 = sand.u32 %s226, 1
        %s2395 = smul.addr %s2394, 256
        %s2396 = scalar_lea.vmem [#allocation5], %s2395
        // Predicated region
        $region80: #{_rfa_forward_impl.1} parent=70 // pred_check
          %p2397 = pneg %p236
        $region81: #{_rfa_forward_impl.1} parent=70 // pred_check_branch
          %2399 = sbr.rel (%p2397) target = $region83
        $region82: #{_rfa_forward_impl.1} parent=70 // pred_region
          %s2400 = smul.u32 4, %s27
          %s2401 = smul.addr %s26, 64
          %s2402 = sadd.s32 %s2400, %s2401
          %s2403 = smul.addr %s2402, 8
          %s2404 = scalar_lea.vmem %s8, %s2403
          // Predicated region
          $region84: #{_rfa_forward_impl.1} parent=82 // pred_check
            _
          $region85: #{_rfa_forward_impl.1} parent=82 // pred_check_branch
            %2406 = sbr.rel (0) target = $region87
          $region86: #{_rfa_forward_impl.1} parent=82 // pred_region
            // Predicated region
            $region88: #{_rfa_forward_impl.1} parent=86 // pred_check
              _
            $region89: #{_rfa_forward_impl.1} parent=86 // pred_check_branch
              %2408 = sbr.rel (0) target = $region91
            $region90: #{_rfa_forward_impl.1} parent=86 // pred_region
              loop: start=0, step=1, limit=1
              $region92: #{_rfa_forward_impl.1} parent=90 // loop_pre_header
                _
              $region93: #{_rfa_forward_impl.1} parent=90 // loop_header
                %s2410 = sphi 0, %s2414
                %p2411 = scmp.ge.s32.totalorder %s2410, 1
                %s2415 = sphi %s2396, %s2396
                %s2416 = sphi %s2404, %s2404
              $region94: #{_rfa_forward_impl.1} parent=90 // loop_header_branch
                %2413 = sbr.rel (%p2411) target = $region98
              $region95: #{_rfa_forward_impl.1} parent=90 // loop_body
                %v2417 = vld [vmem:[%s2415] sm:$0xff]
                %2418 = vst [vmem:[%s2416] sm:$0xff] %v2417
                %v2419 = vld [vmem:[%s2415 + $0x8] sm:$0xff]
                %2420 = vst [vmem:[%s2416 + $0x8] sm:$0xff] %v2419
                %v2421 = vld [vmem:[%s2415 + $0x10] sm:$0xff]
                %2422 = vst [vmem:[%s2416 + $0x10] sm:$0xff] %v2421
                %v2423 = vld [vmem:[%s2415 + $0x18] sm:$0xff]
                %2424 = vst [vmem:[%s2416 + $0x18] sm:$0xff] %v2423
                %v2425 = vld [vmem:[%s2415 + $0x20] sm:$0xff]
                %2426 = vst [vmem:[%s2416 + $0x40] sm:$0xff] %v2425
                %v2427 = vld [vmem:[%s2415 + $0x28] sm:$0xff]
                %2428 = vst [vmem:[%s2416 + $0x48] sm:$0xff] %v2427
                %v2429 = vld [vmem:[%s2415 + $0x30] sm:$0xff]
                %2430 = vst [vmem:[%s2416 + $0x50] sm:$0xff] %v2429
                %v2431 = vld [vmem:[%s2415 + $0x38] sm:$0xff]
                %2432 = vst [vmem:[%s2416 + $0x58] sm:$0xff] %v2431
                %v2433 = vld [vmem:[%s2415 + $0x40] sm:$0xff]
                %2434 = vst [vmem:[%s2416 + $0x80] sm:$0xff] %v2433
                %v2435 = vld [vmem:[%s2415 + $0x48] sm:$0xff]
                %2436 = vst [vmem:[%s2416 + $0x88] sm:$0xff] %v2435
                %v2437 = vld [vmem:[%s2415 + $0x50] sm:$0xff]
                %2438 = vst [vmem:[%s2416 + $0x90] sm:$0xff] %v2437
                %v2439 = vld [vmem:[%s2415 + $0x58] sm:$0xff]
                %2440 = vst [vmem:[%s2416 + $0x98] sm:$0xff] %v2439
                %v2441 = vld [vmem:[%s2415 + $0x60] sm:$0xff]
                %2442 = vst [vmem:[%s2416 + $0xc0] sm:$0xff] %v2441
                %v2443 = vld [vmem:[%s2415 + $0x68] sm:$0xff]
                %2444 = vst [vmem:[%s2416 + $0xc8] sm:$0xff] %v2443
                %v2445 = vld [vmem:[%s2415 + $0x70] sm:$0xff]
                %2446 = vst [vmem:[%s2416 + $0xd0] sm:$0xff] %v2445
                %v2447 = vld [vmem:[%s2415 + $0x78] sm:$0xff]
                %2448 = vst [vmem:[%s2416 + $0xd8] sm:$0xff] %v2447
                %v2449 = vld [vmem:[%s2415 + $0x80] sm:$0xff]
                %2450 = vst [vmem:[%s2416 + $0x100] sm:$0xff] %v2449
                %v2451 = vld [vmem:[%s2415 + $0x88] sm:$0xff]
                %2452 = vst [vmem:[%s2416 + $0x108] sm:$0xff] %v2451
                %v2453 = vld [vmem:[%s2415 + $0x90] sm:$0xff]
                %2454 = vst [vmem:[%s2416 + $0x110] sm:$0xff] %v2453
                %v2455 = vld [vmem:[%s2415 + $0x98] sm:$0xff]
                %2456 = vst [vmem:[%s2416 + $0x118] sm:$0xff] %v2455
                %v2457 = vld [vmem:[%s2415 + $0xa0] sm:$0xff]
                %2458 = vst [vmem:[%s2416 + $0x140] sm:$0xff] %v2457
                %v2459 = vld [vmem:[%s2415 + $0xa8] sm:$0xff]
                %2460 = vst [vmem:[%s2416 + $0x148] sm:$0xff] %v2459
                %v2461 = vld [vmem:[%s2415 + $0xb0] sm:$0xff]
                %2462 = vst [vmem:[%s2416 + $0x150] sm:$0xff] %v2461
                %v2463 = vld [vmem:[%s2415 + $0xb8] sm:$0xff]
                %2464 = vst [vmem:[%s2416 + $0x158] sm:$0xff] %v2463
                %v2465 = vld [vmem:[%s2415 + $0xc0] sm:$0xff]
                %2466 = vst [vmem:[%s2416 + $0x180] sm:$0xff] %v2465
                %v2467 = vld [vmem:[%s2415 + $0xc8] sm:$0xff]
                %2468 = vst [vmem:[%s2416 + $0x188] sm:$0xff] %v2467
                %v2469 = vld [vmem:[%s2415 + $0xd0] sm:$0xff]
                %2470 = vst [vmem:[%s2416 + $0x190] sm:$0xff] %v2469
                %v2471 = vld [vmem:[%s2415 + $0xd8] sm:$0xff]
                %2472 = vst [vmem:[%s2416 + $0x198] sm:$0xff] %v2471
                %v2473 = vld [vmem:[%s2415 + $0xe0] sm:$0xff]
                %2474 = vst [vmem:[%s2416 + $0x1c0] sm:$0xff] %v2473
                %v2475 = vld [vmem:[%s2415 + $0xe8] sm:$0xff]
                %2476 = vst [vmem:[%s2416 + $0x1c8] sm:$0xff] %v2475
                %v2477 = vld [vmem:[%s2415 + $0xf0] sm:$0xff]
                %2478 = vst [vmem:[%s2416 + $0x1d0] sm:$0xff] %v2477
                %v2479 = vld [vmem:[%s2415 + $0xf8] sm:$0xff]
                %2480 = vst [vmem:[%s2416 + $0x1d8] sm:$0xff] %v2479
              $region96: #{_rfa_forward_impl.1} parent=90 // loop_footer
                %s2414 = sadd.s32 1, %s2410
              $region97: #{_rfa_forward_impl.1} parent=90 // loop_footer_branch
                %2409 = sbr.rel target = $region93
              $region98: #{_rfa_forward_impl.1} parent=90 // loop_exit
                _
            $region91: #{_rfa_forward_impl.1} parent=86 // pred_fallthru
              _
            // Predicated region
            $region99: #{_rfa_forward_impl.1} parent=86 // pred_check
              _
            $region100: #{_rfa_forward_impl.1} parent=86 // pred_check_branch
              %2482 = sbr.rel target = $region102
            $region101: #{_rfa_forward_impl.1} parent=86 // pred_region
              _
            $region102: #{_rfa_forward_impl.1} parent=86 // pred_fallthru
              _
          $region87: #{_rfa_forward_impl.1} parent=82 // pred_fallthru
            _
          %2483 = vnop
        $region83: #{_rfa_forward_impl.1} parent=70 // pred_fallthru
          _
      $region71: #{_rfa_forward_impl.1} parent=5 // pred_fallthru
        _
      %p2484 = scmp.le.s32.totalorder 2, %s17
      // Predicated region
      $region103: #{_rfa_forward_impl.1} parent=5 // pred_check
        %p2485 = pneg %p2484
      $region104: #{_rfa_forward_impl.1} parent=5 // pred_check_branch
        %2487 = sbr.rel (%p2485) target = $region106
      $region105: #{_rfa_forward_impl.1} parent=5 // pred_region
        %s2488 = ssub.s32 %s17, 2
        // Predicated region
        $region107: #{_rfa_forward_impl.1} parent=105 // pred_check
          %p2489 = pneg %p242
        $region108: #{_rfa_forward_impl.1} parent=105 // pred_check_branch
          %2491 = sbr.rel (%p2489) target = $region110
        $region109: #{_rfa_forward_impl.1} parent=105 // pred_region
          %s2492 = sand.u32 %s227, 1
          %s2493 = sand.u32 %s227, 1
          %s2494 = smul.addr %s2493, 256
          %s2495 = scalar_lea.vmem [#allocation5], %s2494
        $region110: #{_rfa_forward_impl.1} parent=105 // pred_fallthru
          _
      $region106: #{_rfa_forward_impl.1} parent=5 // pred_fallthru
        _
    $region6: #{_rfa_forward_impl.1} parent=1 // loop_footer
      %s21 = sadd.s32 1, %s17
    $region7: #{_rfa_forward_impl.1} parent=1 // loop_footer_branch
      %16 = sbr.rel target = $region3
    $region8: #{_rfa_forward_impl.1} parent=1 // loop_exit
      _
    %2496 = vsyncpa [#allocation4], 1
    %s2497 = scalar_lea.sflag [#allocation4], 1
    %2498 = vsyncpa %s2497, 1

</llo_original>
